<compile_context>
chip_gen: v7x
topology: tpu7x:2x2x1
jax: 0.10.0
libtpu: 0.0.40
codegen_flags: <defaults>
</compile_context>

<pallas_src>
import math

import jax
import jax.numpy as jnp
from jax.experimental import pallas as pl
from jax.experimental.pallas import tpu as pltpu  # noqa: F401

# Small, tile-friendly shapes
B, S, D, H, F = 2, 8, 32, 4, 64      # batch, seq, d_model, heads, d_ff
DK = D // H                          # head dim
N = B * S                            # flattened token count
EPS = 1e-6                           # LayerNormalization eps
NEG_INF = -1e9


def _layernorm(x, gamma, beta, *, use_pl_reciprocal):
    # Matches the reference LayerNormalization: unbiased std, (std + eps) denom.
    mean = jnp.mean(x, axis=-1, keepdims=True)
    var = jnp.sum((x - mean) ** 2, axis=-1, keepdims=True) / (x.shape[-1] - 1)
    denom = jnp.sqrt(var) + EPS
    inv = pl.reciprocal(denom, approx=True) if use_pl_reciprocal else 1.0 / denom
    return gamma * (x - mean) * inv + beta


def encoder_block_kernel(
    x_ref, keep_ref, blk_bias_ref,
    wqkv_ref, bqkv_ref, wo_ref, bo_ref,
    g1_ref, be1_ref,
    w1_ref, b1_ref, w2_ref, b2_ref,
    g2_ref, be2_ref,
    o_ref,
):
    x = x_ref[...]              # (N, D) flattened tokens
    keep = keep_ref[...]        # (1, N) key keep flags (1.0 keep / 0.0 masked)

    # ---- residual connection 0: x + SelfAttention(LayerNorm(x)) ----
    xn = _layernorm(x, g1_ref[...], be1_ref[...], use_pl_reciprocal=True)

    # Fused QKV projection: one (N, D) @ (D, 3D) MXU pass.  The 1/sqrt(d_k)
    # scale is already folded into the Q columns of wqkv / bqkv.
    qkv = (jnp.dot(xn, wqkv_ref[...], preferred_element_type=jnp.float32)
           + bqkv_ref[...])                                  # (N, 3D)

    # Additive attention-score bias, computed once (hoisted out of the head
    # loop): block-diagonal term (no cross-batch attention) + padding term
    # (masked_fill(source_mask == 0, -1e9)).
    bias = blk_bias_ref[...] + jnp.where(keep != 0.0, 0.0, NEG_INF)   # (N, N)

    wo = wo_ref[...]                                        # (D, D)
    attn = jnp.zeros((N, D), jnp.float32)
    for h in range(H):                                      # static unroll, H = 4
        q_h = qkv[:, h * DK:(h + 1) * DK]                   # (N, DK), pre-scaled
        k_h = qkv[:, D + h * DK:D + (h + 1) * DK]           # (N, DK)
        v_h = qkv[:, 2 * D + h * DK:2 * D + (h + 1) * DK]   # (N, DK)
        s = jnp.einsum('qd,kd->qk', q_h, k_h,
                       preferred_element_type=jnp.float32) + bias    # (N, N)
        m = jnp.max(s, axis=-1, keepdims=True)
        e = jnp.exp(s - m)
        p = e * pl.reciprocal(jnp.sum(e, axis=-1, keepdims=True), approx=True)
        head = jnp.dot(p, v_h, preferred_element_type=jnp.float32)   # (N, DK)
        # concat(heads) @ wo == sum_h head_h @ wo[h*DK:(h+1)*DK, :]
        attn = attn + jnp.dot(head, wo[h * DK:(h + 1) * DK, :],
                              preferred_element_type=jnp.float32)
    x1 = x + attn + bo_ref[...]

    # ---- residual connection 1: x1 + FeedForward(LayerNorm(x1)) ----
    x1n = _layernorm(x1, g2_ref[...], be2_ref[...], use_pl_reciprocal=True)
    h1 = jnp.maximum(
        jnp.dot(x1n, w1_ref[...], preferred_element_type=jnp.float32)
        + b1_ref[...], 0.0)
    ff = jnp.dot(h1, w2_ref[...], preferred_element_type=jnp.float32) + b2_ref[...]
    o_ref[...] = x1 + ff


def encoder_block(x, mask, params):
    """x: (B, S, D) f32; mask: (B, 1, S) f32 (1.0 = keep); params: 16-tuple."""
    (wq, bq, wk, bk, wv, bv, wo, bo, g1, be1, w1, b1, w2, b2, g2, be2) = params

    # One-time parameter prep (wrapper-side): fuse Q|K|V and fold the
    # attention scale into the Q columns.
    scale = 1.0 / math.sqrt(DK)
    w_qkv = jnp.concatenate([wq * scale, wk, wv], axis=1)    # (D, 3D)
    b_qkv = jnp.concatenate([bq * scale, bk, bv], axis=1)    # (1, 3D)

    # Flatten tokens and key-keep flags (free, contiguous reshapes).
    x_flat = x.reshape(N, D)
    keep = mask.reshape(1, N)

    # Structural (input-independent) block-diagonal bias preventing the
    # flattened batch elements from attending to each other.
    same_batch = jnp.kron(jnp.eye(B, dtype=jnp.float32),
                          jnp.ones((S, S), jnp.float32))     # (N, N)
    blk_bias = jnp.where(same_batch > 0.0, 0.0, NEG_INF)

    out_flat = pl.pallas_call(
        encoder_block_kernel,
        out_shape=jax.ShapeDtypeStruct((N, D), jnp.float32),
        # Grid-free: no grid / BlockSpecs -> every operand is a whole-array
        # VMEM block and the kernel body runs exactly once.
    )(x_flat, keep, blk_bias, w_qkv, b_qkv, wo, bo,
      g1, be1, w1, b1, w2, b2, g2, be2)
    return out_flat.reshape(B, S, D)


def encoder_block_ref(x, mask, params):
    """Pure-JAX reference with identical semantics (for validation)."""
    (wq, bq, wk, bk, wv, bv, wo, bo, g1, be1, w1, b1, w2, b2, g2, be2) = params
    out = []
    for b in range(B):
        xb, mb = x[b], mask[b]                       # (S, D), (1, S)
        xn = _layernorm(xb, g1, be1, use_pl_reciprocal=False)
        q, k, v = xn @ wq + bq, xn @ wk + bk, xn @ wv + bv
        heads = []
        for h in range(H):
            sl = slice(h * DK, (h + 1) * DK)
            s = (q[:, sl] @ k[:, sl].T) / math.sqrt(DK)
            s = jnp.where(mb == 0.0, -1e9, s)
            heads.append(jax.nn.softmax(s, axis=-1) @ v[:, sl])
        x1 = xb + (jnp.concatenate(heads, axis=-1) @ wo + bo)
        x1n = _layernorm(x1, g2, be2, use_pl_reciprocal=False)
        out.append(x1 + (jnp.maximum(x1n @ w1 + b1, 0.0) @ w2 + b2))
    return jnp.stack(out)


def init_params(key):
    ks = jax.random.split(key, 8)
    sd = 0.05
    params = (
        jax.random.normal(ks[0], (D, D), jnp.float32) * sd, jnp.zeros((1, D), jnp.float32),  # w_q, b_q
        jax.random.normal(ks[1], (D, D), jnp.float32) * sd, jnp.zeros((1, D), jnp.float32),  # w_k, b_k
        jax.random.normal(ks[2], (D, D), jnp.float32) * sd, jnp.zeros((1, D), jnp.float32),  # w_v, b_v
        jax.random.normal(ks[3], (D, D), jnp.float32) * sd, jnp.zeros((1, D), jnp.float32),  # w_o, b_o
        jnp.ones((1, D), jnp.float32), jnp.zeros((1, D), jnp.float32),                       # ln1
        jax.random.normal(ks[4], (D, F), jnp.float32) * sd,
        jax.random.normal(ks[5], (1, F), jnp.float32) * sd,                                  # ff w1, b1
        jax.random.normal(ks[6], (F, D), jnp.float32) * sd,
        jax.random.normal(ks[7], (1, D), jnp.float32) * sd,                                  # ff w2, b2
        jnp.ones((1, D), jnp.float32), jnp.zeros((1, D), jnp.float32),                       # ln2
    )
    return params


if __name__ == "__main__":
    key = jax.random.PRNGKey(0)
    k_x, k_p = jax.random.split(key)

    x = jax.random.normal(k_x, (B, S, D), jnp.float32)
    # padding mask: batch 1 has its last 2 key positions masked out
    mask = jnp.ones((B, 1, S), jnp.float32).at[1, 0, S - 2:].set(0.0)
    params = init_params(k_p)

    out = encoder_block(x, mask, params)
    out = jax.block_until_ready(out)

    ref = encoder_block_ref(x, mask, params)
    assert out.shape == (B, S, D) and out.dtype == jnp.float32
    assert jnp.all(jnp.isfinite(out))
    assert jnp.allclose(out, ref, rtol=1e-2, atol=1e-2), "mismatch vs reference"

    print("KERNEL_OK")
</pallas_src>

<mosaic_0001>
module attributes {stable_mosaic.version = 11 : i64} {
  func.func @encoder_block_kernel(%arg0: memref<16x32xf32, #tpu.memory_space<vmem>>, %arg1: memref<1x16xf32, #tpu.memory_space<vmem>>, %arg2: memref<16x16xf32, #tpu.memory_space<vmem>>, %arg3: memref<32x96xf32, #tpu.memory_space<vmem>>, %arg4: memref<1x96xf32, #tpu.memory_space<vmem>>, %arg5: memref<32x32xf32, #tpu.memory_space<vmem>>, %arg6: memref<1x32xf32, #tpu.memory_space<vmem>>, %arg7: memref<1x32xf32, #tpu.memory_space<vmem>>, %arg8: memref<1x32xf32, #tpu.memory_space<vmem>>, %arg9: memref<32x64xf32, #tpu.memory_space<vmem>>, %arg10: memref<1x64xf32, #tpu.memory_space<vmem>>, %arg11: memref<64x32xf32, #tpu.memory_space<vmem>>, %arg12: memref<1x32xf32, #tpu.memory_space<vmem>>, %arg13: memref<1x32xf32, #tpu.memory_space<vmem>>, %arg14: memref<1x32xf32, #tpu.memory_space<vmem>>, %arg15: memref<16x32xf32, #tpu.memory_space<vmem>>) attributes {dimension_semantics = [], scalar_prefetch = 0 : i64, scratch_operands = 0 : i64, tpu.core_type = #tpu.core_type<tc>} {
    %c0 = arith.constant 0 : index
    %c0_0 = arith.constant 0 : index
    %0 = vector.load %arg0[%c0, %c0_0] : memref<16x32xf32, #tpu.memory_space<vmem>>, vector<16x32xf32>
    %c0_1 = arith.constant 0 : index
    %c0_2 = arith.constant 0 : index
    %1 = vector.load %arg1[%c0_1, %c0_2] : memref<1x16xf32, #tpu.memory_space<vmem>>, vector<1x16xf32>
    %c0_3 = arith.constant 0 : index
    %c0_4 = arith.constant 0 : index
    %2 = vector.load %arg7[%c0_3, %c0_4] : memref<1x32xf32, #tpu.memory_space<vmem>>, vector<1x32xf32>
    %c0_5 = arith.constant 0 : index
    %c0_6 = arith.constant 0 : index
    %3 = vector.load %arg8[%c0_5, %c0_6] : memref<1x32xf32, #tpu.memory_space<vmem>>, vector<1x32xf32>
    %cst = arith.constant dense<0.000000e+00> : vector<16xf32>
    %4 = vector.multi_reduction <add>, %0, %cst [1] : vector<16x32xf32> to vector<16xf32>
    %5 = vector.shape_cast %4 : vector<16xf32> to vector<16x1xf32>
    %cst_7 = arith.constant 3.200000e+01 : f32
    %6 = vector.broadcast %cst_7 : f32 to vector<16x1xf32>
    %7 = arith.divf %5, %6 : vector<16x1xf32>
    %8 = vector.broadcast %7 : vector<16x1xf32> to vector<16x32xf32>
    %9 = arith.subf %0, %8 : vector<16x32xf32>
    %10 = arith.mulf %9, %9 : vector<16x32xf32>
    %cst_8 = arith.constant dense<0.000000e+00> : vector<16xf32>
    %11 = vector.multi_reduction <add>, %10, %cst_8 [1] : vector<16x32xf32> to vector<16xf32>
    %12 = vector.shape_cast %11 : vector<16xf32> to vector<16x1xf32>
    %cst_9 = arith.constant 3.100000e+01 : f32
    %13 = vector.broadcast %cst_9 : f32 to vector<16x1xf32>
    %14 = arith.divf %12, %13 : vector<16x1xf32>
    %15 = math.sqrt %14 : vector<16x1xf32>
    %cst_10 = arith.constant 9.99999997E-7 : f32
    %16 = vector.broadcast %cst_10 : f32 to vector<16x1xf32>
    %17 = arith.addf %15, %16 : vector<16x1xf32>
    %18 = tpu.reciprocal %17 {approx = true} : vector<16x1xf32> -> vector<16x1xf32>
    %19 = vector.broadcast %7 : vector<16x1xf32> to vector<16x32xf32>
    %20 = arith.subf %0, %19 : vector<16x32xf32>
    %21 = vector.broadcast %2 : vector<1x32xf32> to vector<16x32xf32>
    %22 = arith.mulf %21, %20 : vector<16x32xf32>
    %23 = vector.broadcast %18 : vector<16x1xf32> to vector<16x32xf32>
    %24 = arith.mulf %22, %23 : vector<16x32xf32>
    %25 = vector.broadcast %3 : vector<1x32xf32> to vector<16x32xf32>
    %26 = arith.addf %24, %25 : vector<16x32xf32>
    %c0_11 = arith.constant 0 : index
    %c0_12 = arith.constant 0 : index
    %27 = vector.load %arg3[%c0_11, %c0_12] : memref<32x96xf32, #tpu.memory_space<vmem>>, vector<32x96xf32>
    %cst_13 = arith.constant dense<0.000000e+00> : vector<16x96xf32>
    %28 = tpu.matmul %26, %27, %cst_13 {dimension_numbers = #tpu.dot_dimension_numbers<[1], [0], [0], [1], [0, 0, 1, 1], [], []>} : vector<16x32xf32>, vector<32x96xf32>, vector<16x96xf32> -> vector<16x96xf32>
    %c0_14 = arith.constant 0 : index
    %c0_15 = arith.constant 0 : index
    %29 = vector.load %arg4[%c0_14, %c0_15] : memref<1x96xf32, #tpu.memory_space<vmem>>, vector<1x96xf32>
    %30 = vector.broadcast %29 : vector<1x96xf32> to vector<16x96xf32>
    %31 = arith.addf %28, %30 : vector<16x96xf32>
    %c0_16 = arith.constant 0 : index
    %c0_17 = arith.constant 0 : index
    %32 = vector.load %arg2[%c0_16, %c0_17] : memref<16x16xf32, #tpu.memory_space<vmem>>, vector<16x16xf32>
    %cst_18 = arith.constant 0.000000e+00 : f32
    %33 = vector.broadcast %cst_18 : f32 to vector<1x16xf32>
    %34 = arith.cmpf one, %1, %33 : vector<1x16xf32>
    %cst_19 = arith.constant 0.000000e+00 : f32
    %cst_20 = arith.constant -1.000000e+09 : f32
    %35 = vector.broadcast %cst_19 : f32 to vector<1x16xf32>
    %36 = vector.broadcast %cst_20 : f32 to vector<1x16xf32>
    %37 = arith.select %34, %35, %36 : vector<1x16xi1>, vector<1x16xf32>
    %38 = vector.broadcast %37 : vector<1x16xf32> to vector<16x16xf32>
    %39 = arith.addf %32, %38 : vector<16x16xf32>
    %c0_21 = arith.constant 0 : index
    %c0_22 = arith.constant 0 : index
    %40 = vector.load %arg5[%c0_21, %c0_22] : memref<32x32xf32, #tpu.memory_space<vmem>>, vector<32x32xf32>
    %cst_23 = arith.constant 0.000000e+00 : f32
    %41 = vector.broadcast %cst_23 : f32 to vector<16x32xf32>
    %42 = vector.extract_strided_slice %31 {offsets = [0, 0], sizes = [16, 8], strides = [1, 1]} : vector<16x96xf32> to vector<16x8xf32>
    %43 = vector.extract_strided_slice %31 {offsets = [0, 32], sizes = [16, 8], strides = [1, 1]} : vector<16x96xf32> to vector<16x8xf32>
    %44 = vector.extract_strided_slice %31 {offsets = [0, 64], sizes = [16, 8], strides = [1, 1]} : vector<16x96xf32> to vector<16x8xf32>
    "tpu.trace_start"() <{level = 10 : i32, message = "qd,kd->qk"}> : () -> ()
    %cst_24 = arith.constant dense<0.000000e+00> : vector<16x16xf32>
    %45 = tpu.matmul %42, %43, %cst_24 {dimension_numbers = #tpu.dot_dimension_numbers<[1], [1], [0], [0], [0, 0, 1, 0], [], []>} : vector<16x8xf32>, vector<16x8xf32>, vector<16x16xf32> -> vector<16x16xf32>
    "tpu.trace_stop"() : () -> ()
    %46 = arith.addf %45, %39 : vector<16x16xf32>
    %cst_25 = arith.constant dense<0xFF800000> : vector<16xf32>
    %47 = vector.multi_reduction <maximumf>, %46, %cst_25 [1] : vector<16x16xf32> to vector<16xf32>
    %48 = vector.shape_cast %47 : vector<16xf32> to vector<16x1xf32>
    %49 = vector.broadcast %48 : vector<16x1xf32> to vector<16x16xf32>
    %50 = arith.subf %46, %49 : vector<16x16xf32>
    %51 = math.exp %50 : vector<16x16xf32>
    %cst_26 = arith.constant dense<0.000000e+00> : vector<16xf32>
    %52 = vector.multi_reduction <add>, %51, %cst_26 [1] : vector<16x16xf32> to vector<16xf32>
    %53 = vector.shape_cast %52 : vector<16xf32> to vector<16x1xf32>
    %54 = tpu.reciprocal %53 {approx = true} : vector<16x1xf32> -> vector<16x1xf32>
    %55 = vector.broadcast %54 : vector<16x1xf32> to vector<16x16xf32>
    %56 = arith.mulf %51, %55 : vector<16x16xf32>
    %cst_27 = arith.constant dense<0.000000e+00> : vector<16x8xf32>
    %57 = tpu.matmul %56, %44, %cst_27 {dimension_numbers = #tpu.dot_dimension_numbers<[1], [0], [0], [1], [0, 0, 1, 1], [], []>} : vector<16x16xf32>, vector<16x8xf32>, vector<16x8xf32> -> vector<16x8xf32>
    %58 = vector.extract_strided_slice %40 {offsets = [0, 0], sizes = [8, 32], strides = [1, 1]} : vector<32x32xf32> to vector<8x32xf32>
    %cst_28 = arith.constant dense<0.000000e+00> : vector<16x32xf32>
    %59 = tpu.matmul %57, %58, %cst_28 {dimension_numbers = #tpu.dot_dimension_numbers<[1], [0], [0], [1], [0, 0, 1, 1], [], []>} : vector<16x8xf32>, vector<8x32xf32>, vector<16x32xf32> -> vector<16x32xf32>
    %60 = arith.addf %41, %59 : vector<16x32xf32>
    %61 = vector.extract_strided_slice %31 {offsets = [0, 8], sizes = [16, 8], strides = [1, 1]} : vector<16x96xf32> to vector<16x8xf32>
    %62 = vector.extract_strided_slice %31 {offsets = [0, 40], sizes = [16, 8], strides = [1, 1]} : vector<16x96xf32> to vector<16x8xf32>
    %63 = vector.extract_strided_slice %31 {offsets = [0, 72], sizes = [16, 8], strides = [1, 1]} : vector<16x96xf32> to vector<16x8xf32>
    "tpu.trace_start"() <{level = 10 : i32, message = "qd,kd->qk"}> : () -> ()
    %cst_29 = arith.constant dense<0.000000e+00> : vector<16x16xf32>
    %64 = tpu.matmul %61, %62, %cst_29 {dimension_numbers = #tpu.dot_dimension_numbers<[1], [1], [0], [0], [0, 0, 1, 0], [], []>} : vector<16x8xf32>, vector<16x8xf32>, vector<16x16xf32> -> vector<16x16xf32>
    "tpu.trace_stop"() : () -> ()
    %65 = arith.addf %64, %39 : vector<16x16xf32>
    %cst_30 = arith.constant dense<0xFF800000> : vector<16xf32>
    %66 = vector.multi_reduction <maximumf>, %65, %cst_30 [1] : vector<16x16xf32> to vector<16xf32>
    %67 = vector.shape_cast %66 : vector<16xf32> to vector<16x1xf32>
    %68 = vector.broadcast %67 : vector<16x1xf32> to vector<16x16xf32>
    %69 = arith.subf %65, %68 : vector<16x16xf32>
    %70 = math.exp %69 : vector<16x16xf32>
    %cst_31 = arith.constant dense<0.000000e+00> : vector<16xf32>
    %71 = vector.multi_reduction <add>, %70, %cst_31 [1] : vector<16x16xf32> to vector<16xf32>
    %72 = vector.shape_cast %71 : vector<16xf32> to vector<16x1xf32>
    %73 = tpu.reciprocal %72 {approx = true} : vector<16x1xf32> -> vector<16x1xf32>
    %74 = vector.broadcast %73 : vector<16x1xf32> to vector<16x16xf32>
    %75 = arith.mulf %70, %74 : vector<16x16xf32>
    %cst_32 = arith.constant dense<0.000000e+00> : vector<16x8xf32>
    %76 = tpu.matmul %75, %63, %cst_32 {dimension_numbers = #tpu.dot_dimension_numbers<[1], [0], [0], [1], [0, 0, 1, 1], [], []>} : vector<16x16xf32>, vector<16x8xf32>, vector<16x8xf32> -> vector<16x8xf32>
    %77 = vector.extract_strided_slice %40 {offsets = [8, 0], sizes = [8, 32], strides = [1, 1]} : vector<32x32xf32> to vector<8x32xf32>
    %cst_33 = arith.constant dense<0.000000e+00> : vector<16x32xf32>
    %78 = tpu.matmul %76, %77, %cst_33 {dimension_numbers = #tpu.dot_dimension_numbers<[1], [0], [0], [1], [0, 0, 1, 1], [], []>} : vector<16x8xf32>, vector<8x32xf32>, vector<16x32xf32> -> vector<16x32xf32>
    %79 = arith.addf %60, %78 : vector<16x32xf32>
    %80 = vector.extract_strided_slice %31 {offsets = [0, 16], sizes = [16, 8], strides = [1, 1]} : vector<16x96xf32> to vector<16x8xf32>
    %81 = vector.extract_strided_slice %31 {offsets = [0, 48], sizes = [16, 8], strides = [1, 1]} : vector<16x96xf32> to vector<16x8xf32>
    %82 = vector.extract_strided_slice %31 {offsets = [0, 80], sizes = [16, 8], strides = [1, 1]} : vector<16x96xf32> to vector<16x8xf32>
    "tpu.trace_start"() <{level = 10 : i32, message = "qd,kd->qk"}> : () -> ()
    %cst_34 = arith.constant dense<0.000000e+00> : vector<16x16xf32>
    %83 = tpu.matmul %80, %81, %cst_34 {dimension_numbers = #tpu.dot_dimension_numbers<[1], [1], [0], [0], [0, 0, 1, 0], [], []>} : vector<16x8xf32>, vector<16x8xf32>, vector<16x16xf32> -> vector<16x16xf32>
    "tpu.trace_stop"() : () -> ()
    %84 = arith.addf %83, %39 : vector<16x16xf32>
    %cst_35 = arith.constant dense<0xFF800000> : vector<16xf32>
    %85 = vector.multi_reduction <maximumf>, %84, %cst_35 [1] : vector<16x16xf32> to vector<16xf32>
    %86 = vector.shape_cast %85 : vector<16xf32> to vector<16x1xf32>
    %87 = vector.broadcast %86 : vector<16x1xf32> to vector<16x16xf32>
    %88 = arith.subf %84, %87 : vector<16x16xf32>
    %89 = math.exp %88 : vector<16x16xf32>
    %cst_36 = arith.constant dense<0.000000e+00> : vector<16xf32>
    %90 = vector.multi_reduction <add>, %89, %cst_36 [1] : vector<16x16xf32> to vector<16xf32>
    %91 = vector.shape_cast %90 : vector<16xf32> to vector<16x1xf32>
    %92 = tpu.reciprocal %91 {approx = true} : vector<16x1xf32> -> vector<16x1xf32>
    %93 = vector.broadcast %92 : vector<16x1xf32> to vector<16x16xf32>
    %94 = arith.mulf %89, %93 : vector<16x16xf32>
    %cst_37 = arith.constant dense<0.000000e+00> : vector<16x8xf32>
    %95 = tpu.matmul %94, %82, %cst_37 {dimension_numbers = #tpu.dot_dimension_numbers<[1], [0], [0], [1], [0, 0, 1, 1], [], []>} : vector<16x16xf32>, vector<16x8xf32>, vector<16x8xf32> -> vector<16x8xf32>
    %96 = vector.extract_strided_slice %40 {offsets = [16, 0], sizes = [8, 32], strides = [1, 1]} : vector<32x32xf32> to vector<8x32xf32>
    %cst_38 = arith.constant dense<0.000000e+00> : vector<16x32xf32>
    %97 = tpu.matmul %95, %96, %cst_38 {dimension_numbers = #tpu.dot_dimension_numbers<[1], [0], [0], [1], [0, 0, 1, 1], [], []>} : vector<16x8xf32>, vector<8x32xf32>, vector<16x32xf32> -> vector<16x32xf32>
    %98 = arith.addf %79, %97 : vector<16x32xf32>
    %99 = vector.extract_strided_slice %31 {offsets = [0, 24], sizes = [16, 8], strides = [1, 1]} : vector<16x96xf32> to vector<16x8xf32>
    %100 = vector.extract_strided_slice %31 {offsets = [0, 56], sizes = [16, 8], strides = [1, 1]} : vector<16x96xf32> to vector<16x8xf32>
    %101 = vector.extract_strided_slice %31 {offsets = [0, 88], sizes = [16, 8], strides = [1, 1]} : vector<16x96xf32> to vector<16x8xf32>
    "tpu.trace_start"() <{level = 10 : i32, message = "qd,kd->qk"}> : () -> ()
    %cst_39 = arith.constant dense<0.000000e+00> : vector<16x16xf32>
    %102 = tpu.matmul %99, %100, %cst_39 {dimension_numbers = #tpu.dot_dimension_numbers<[1], [1], [0], [0], [0, 0, 1, 0], [], []>} : vector<16x8xf32>, vector<16x8xf32>, vector<16x16xf32> -> vector<16x16xf32>
    "tpu.trace_stop"() : () -> ()
    %103 = arith.addf %102, %39 : vector<16x16xf32>
    %cst_40 = arith.constant dense<0xFF800000> : vector<16xf32>
    %104 = vector.multi_reduction <maximumf>, %103, %cst_40 [1] : vector<16x16xf32> to vector<16xf32>
    %105 = vector.shape_cast %104 : vector<16xf32> to vector<16x1xf32>
    %106 = vector.broadcast %105 : vector<16x1xf32> to vector<16x16xf32>
    %107 = arith.subf %103, %106 : vector<16x16xf32>
    %108 = math.exp %107 : vector<16x16xf32>
    %cst_41 = arith.constant dense<0.000000e+00> : vector<16xf32>
    %109 = vector.multi_reduction <add>, %108, %cst_41 [1] : vector<16x16xf32> to vector<16xf32>
    %110 = vector.shape_cast %109 : vector<16xf32> to vector<16x1xf32>
    %111 = tpu.reciprocal %110 {approx = true} : vector<16x1xf32> -> vector<16x1xf32>
    %112 = vector.broadcast %111 : vector<16x1xf32> to vector<16x16xf32>
    %113 = arith.mulf %108, %112 : vector<16x16xf32>
    %cst_42 = arith.constant dense<0.000000e+00> : vector<16x8xf32>
    %114 = tpu.matmul %113, %101, %cst_42 {dimension_numbers = #tpu.dot_dimension_numbers<[1], [0], [0], [1], [0, 0, 1, 1], [], []>} : vector<16x16xf32>, vector<16x8xf32>, vector<16x8xf32> -> vector<16x8xf32>
    %115 = vector.extract_strided_slice %40 {offsets = [24, 0], sizes = [8, 32], strides = [1, 1]} : vector<32x32xf32> to vector<8x32xf32>
    %cst_43 = arith.constant dense<0.000000e+00> : vector<16x32xf32>
    %116 = tpu.matmul %114, %115, %cst_43 {dimension_numbers = #tpu.dot_dimension_numbers<[1], [0], [0], [1], [0, 0, 1, 1], [], []>} : vector<16x8xf32>, vector<8x32xf32>, vector<16x32xf32> -> vector<16x32xf32>
    %117 = arith.addf %98, %116 : vector<16x32xf32>
    %118 = arith.addf %0, %117 : vector<16x32xf32>
    %c0_44 = arith.constant 0 : index
    %c0_45 = arith.constant 0 : index
    %119 = vector.load %arg6[%c0_44, %c0_45] : memref<1x32xf32, #tpu.memory_space<vmem>>, vector<1x32xf32>
    %120 = vector.broadcast %119 : vector<1x32xf32> to vector<16x32xf32>
    %121 = arith.addf %118, %120 : vector<16x32xf32>
    %c0_46 = arith.constant 0 : index
    %c0_47 = arith.constant 0 : index
    %122 = vector.load %arg13[%c0_46, %c0_47] : memref<1x32xf32, #tpu.memory_space<vmem>>, vector<1x32xf32>
    %c0_48 = arith.constant 0 : index
    %c0_49 = arith.constant 0 : index
    %123 = vector.load %arg14[%c0_48, %c0_49] : memref<1x32xf32, #tpu.memory_space<vmem>>, vector<1x32xf32>
    %cst_50 = arith.constant dense<0.000000e+00> : vector<16xf32>
    %124 = vector.multi_reduction <add>, %121, %cst_50 [1] : vector<16x32xf32> to vector<16xf32>
    %125 = vector.shape_cast %124 : vector<16xf32> to vector<16x1xf32>
    %cst_51 = arith.constant 3.200000e+01 : f32
    %126 = vector.broadcast %cst_51 : f32 to vector<16x1xf32>
    %127 = arith.divf %125, %126 : vector<16x1xf32>
    %128 = vector.broadcast %127 : vector<16x1xf32> to vector<16x32xf32>
    %129 = arith.subf %121, %128 : vector<16x32xf32>
    %130 = arith.mulf %129, %129 : vector<16x32xf32>
    %cst_52 = arith.constant dense<0.000000e+00> : vector<16xf32>
    %131 = vector.multi_reduction <add>, %130, %cst_52 [1] : vector<16x32xf32> to vector<16xf32>
    %132 = vector.shape_cast %131 : vector<16xf32> to vector<16x1xf32>
    %cst_53 = arith.constant 3.100000e+01 : f32
    %133 = vector.broadcast %cst_53 : f32 to vector<16x1xf32>
    %134 = arith.divf %132, %133 : vector<16x1xf32>
    %135 = math.sqrt %134 : vector<16x1xf32>
    %cst_54 = arith.constant 9.99999997E-7 : f32
    %136 = vector.broadcast %cst_54 : f32 to vector<16x1xf32>
    %137 = arith.addf %135, %136 : vector<16x1xf32>
    %138 = tpu.reciprocal %137 {approx = true} : vector<16x1xf32> -> vector<16x1xf32>
    %139 = vector.broadcast %127 : vector<16x1xf32> to vector<16x32xf32>
    %140 = arith.subf %121, %139 : vector<16x32xf32>
    %141 = vector.broadcast %122 : vector<1x32xf32> to vector<16x32xf32>
    %142 = arith.mulf %141, %140 : vector<16x32xf32>
    %143 = vector.broadcast %138 : vector<16x1xf32> to vector<16x32xf32>
    %144 = arith.mulf %142, %143 : vector<16x32xf32>
    %145 = vector.broadcast %123 : vector<1x32xf32> to vector<16x32xf32>
    %146 = arith.addf %144, %145 : vector<16x32xf32>
    %c0_55 = arith.constant 0 : index
    %c0_56 = arith.constant 0 : index
    %147 = vector.load %arg9[%c0_55, %c0_56] : memref<32x64xf32, #tpu.memory_space<vmem>>, vector<32x64xf32>
    %cst_57 = arith.constant dense<0.000000e+00> : vector<16x64xf32>
    %148 = tpu.matmul %146, %147, %cst_57 {dimension_numbers = #tpu.dot_dimension_numbers<[1], [0], [0], [1], [0, 0, 1, 1], [], []>} : vector<16x32xf32>, vector<32x64xf32>, vector<16x64xf32> -> vector<16x64xf32>
    %c0_58 = arith.constant 0 : index
    %c0_59 = arith.constant 0 : index
    %149 = vector.load %arg10[%c0_58, %c0_59] : memref<1x64xf32, #tpu.memory_space<vmem>>, vector<1x64xf32>
    %150 = vector.broadcast %149 : vector<1x64xf32> to vector<16x64xf32>
    %151 = arith.addf %148, %150 : vector<16x64xf32>
    %cst_60 = arith.constant 0.000000e+00 : f32
    %152 = vector.broadcast %cst_60 : f32 to vector<16x64xf32>
    %153 = arith.maximumf %151, %152 : vector<16x64xf32>
    %c0_61 = arith.constant 0 : index
    %c0_62 = arith.constant 0 : index
    %154 = vector.load %arg11[%c0_61, %c0_62] : memref<64x32xf32, #tpu.memory_space<vmem>>, vector<64x32xf32>
    %cst_63 = arith.constant dense<0.000000e+00> : vector<16x32xf32>
    %155 = tpu.matmul %153, %154, %cst_63 {dimension_numbers = #tpu.dot_dimension_numbers<[1], [0], [0], [1], [0, 0, 1, 1], [], []>} : vector<16x64xf32>, vector<64x32xf32>, vector<16x32xf32> -> vector<16x32xf32>
    %c0_64 = arith.constant 0 : index
    %c0_65 = arith.constant 0 : index
    %156 = vector.load %arg12[%c0_64, %c0_65] : memref<1x32xf32, #tpu.memory_space<vmem>>, vector<1x32xf32>
    %157 = vector.broadcast %156 : vector<1x32xf32> to vector<16x32xf32>
    %158 = arith.addf %155, %157 : vector<16x32xf32>
    %159 = arith.addf %121, %158 : vector<16x32xf32>
    %c0_66 = arith.constant 0 : index
    %c0_67 = arith.constant 0 : index
    %160 = vector.load %arg15[%c0_66, %c0_67] : memref<16x32xf32, #tpu.memory_space<vmem>>, vector<16x32xf32>
    tpu.vector_store %arg15[%c0_66, %c0_67], %159 {strides = array<i32>} : memref<16x32xf32, #tpu.memory_space<vmem>>, vector<16x32xf32>,
    return
  }
}

</mosaic_0001>

<llo_original>
// kernel: tpu_custom_call.1
$region0: #{tpu_custom_call.1}
  #allocation0 [shape = 'u32[]', space=smem, size = 0x4, offset = 0x4, fixed_abs, tag = 'smem constant byte address 0x4 - core index']
  #allocation1 [shape = 'u32[144,128]{1,0:T(1,128)}', space=vmem, size = 0x12000, scoped, tag = 'internal scratch']
  %s0 = inlined_call_operand.hbm [shape: f32[16,32], index: 0, kind: input, shape index: {}]
  %s1 = inlined_call_operand.vmem [shape: f32[1,16], index: 1, kind: input, shape index: {}]
  %s2 = inlined_call_operand.hbm [shape: f32[16,16], index: 2, kind: input, shape index: {}]
  %s3 = inlined_call_operand.vmem [shape: f32[32,96], index: 3, kind: input, shape index: {}]
  %s4 = inlined_call_operand.vmem [shape: f32[1,96], index: 4, kind: input, shape index: {}]
  %s5 = inlined_call_operand.vmem [shape: f32[32,32], index: 5, kind: input, shape index: {}]
  %s6 = inlined_call_operand.vmem [shape: f32[1,32], index: 6, kind: input, shape index: {}]
  %s7 = inlined_call_operand.vmem [shape: f32[1,32], index: 7, kind: input, shape index: {}]
  %s8 = inlined_call_operand.vmem [shape: f32[1,32], index: 8, kind: input, shape index: {}]
  %s9 = inlined_call_operand.vmem [shape: f32[32,64], index: 9, kind: input, shape index: {}]
  %s10 = inlined_call_operand.vmem [shape: f32[1,64], index: 10, kind: input, shape index: {}]
  %s11 = inlined_call_operand.vmem [shape: f32[64,32], index: 11, kind: input, shape index: {}]
  %s12 = inlined_call_operand.vmem [shape: f32[1,32], index: 12, kind: input, shape index: {}]
  %s13 = inlined_call_operand.vmem [shape: f32[1,32], index: 13, kind: input, shape index: {}]
  %s14 = inlined_call_operand.vmem [shape: f32[1,32], index: 14, kind: input, shape index: {}]
  %s15 = inlined_call_operand.hbm [shape: f32[16,32], index: 15, kind: output, shape index: {}]
  %s16 = sld [smem:[#allocation0]]
  $region78: #{tpu_custom_call.1} parent=0
    _
  %s18 = ssub.s32 1, %s16
  %s19 = scalar_select 0, %s18, %s16
  $region1: #{tpu_custom_call.1} parent=0
    #allocation2 [shape = 'u8[8192]{0}', space=vmem, size = 0x2000, scoped, tag = 'input window, operand 0, single buffered']
    #allocation3 [shape = 's32[1]{0}', space=sflag, size = 0x4, scoped, tag = 'scoped memory for tpu_custom_call.1']
    #allocation4 [shape = 's32[1]{0}', space=sflag, size = 0x4, scoped, tag = 'scoped memory for tpu_custom_call.1']
    #allocation5 [shape = 'u8[8192]{0}', space=vmem, size = 0x2000, scoped, tag = 'input window, operand 2, single buffered']
    #allocation6 [shape = 's32[1]{0}', space=sflag, size = 0x4, scoped, tag = 'scoped memory for tpu_custom_call.1']
    #allocation7 [shape = 'u8[8192]{0}', space=vmem, size = 0x2000, scoped, tag = 'output window, operand 0, single buffered']
    %20 = vsyncpa [#allocation3], 0
    %21 = vsyncpa [#allocation6], 0
    %22 = vsyncpa [#allocation4], 0
    // Predicated region
    $region2: #{tpu_custom_call.1} parent=1 // pred_check
      _
    $region3: #{tpu_custom_call.1} parent=1 // pred_check_branch
      %24 = sbr.rel (0) target = $region5
    $region4: #{tpu_custom_call.1} parent=1 // pred_region
      %s26 = ssub.s32 256, 256
      %27 = vsyncadd [#allocation3], %s26
      %s28 = sshll.u32 [#allocation2], 4
      %s29 = int_to_ptr.vmem [resolvable:$true] %s28
      %34 = dma.hbm_to_vmem [thread:$0]  %s0, 256, %s29, [#allocation3], 128, 128, 8
    $region5: #{tpu_custom_call.1} parent=1 // pred_fallthru
      _
    // Predicated region
    $region6: #{tpu_custom_call.1} parent=1 // pred_check
      _
    $region7: #{tpu_custom_call.1} parent=1 // pred_check_branch
      %36 = sbr.rel (0) target = $region9
    $region8: #{tpu_custom_call.1} parent=1 // pred_region
      _
    $region9: #{tpu_custom_call.1} parent=1 // pred_fallthru
      _
    // Predicated region
    $region10: #{tpu_custom_call.1} parent=1 // pred_check
      _
    $region11: #{tpu_custom_call.1} parent=1 // pred_check_branch
      %38 = sbr.rel (0) target = $region13
    $region12: #{tpu_custom_call.1} parent=1 // pred_region
      %s40 = ssub.s32 256, 256
      %41 = vsyncadd [#allocation6], %s40
      %s42 = sshll.u32 [#allocation5], 4
      %s43 = int_to_ptr.vmem [resolvable:$true] %s42
      %48 = dma.hbm_to_vmem [thread:$0]  %s2, 256, %s43, [#allocation6], 128, 128, 8
    $region13: #{tpu_custom_call.1} parent=1 // pred_fallthru
      _
    // Predicated region
    $region14: #{tpu_custom_call.1} parent=1 // pred_check
      _
    $region15: #{tpu_custom_call.1} parent=1 // pred_check_branch
      %50 = sbr.rel (0) target = $region17
    $region16: #{tpu_custom_call.1} parent=1 // pred_region
      _
    $region17: #{tpu_custom_call.1} parent=1 // pred_fallthru
      _
    // Predicated region
    $region18: #{tpu_custom_call.1} parent=1 // pred_check
      _
    $region19: #{tpu_custom_call.1} parent=1 // pred_check_branch
      %52 = sbr.rel (0) target = $region21
    $region20: #{tpu_custom_call.1} parent=1 // pred_region
      _
    $region21: #{tpu_custom_call.1} parent=1 // pred_fallthru
      _
    // Predicated region
    $region22: #{tpu_custom_call.1} parent=1 // pred_check
      _
    $region23: #{tpu_custom_call.1} parent=1 // pred_check_branch
      %54 = sbr.rel (0) target = $region25
    $region24: #{tpu_custom_call.1} parent=1 // pred_region
      _
    $region25: #{tpu_custom_call.1} parent=1 // pred_fallthru
      _
    // Predicated region
    $region26: #{tpu_custom_call.1} parent=1 // pred_check
      _
    $region27: #{tpu_custom_call.1} parent=1 // pred_check_branch
      %56 = sbr.rel (0) target = $region29
    $region28: #{tpu_custom_call.1} parent=1 // pred_region
      _
    $region29: #{tpu_custom_call.1} parent=1 // pred_fallthru
      _
    // Predicated region
    $region30: #{tpu_custom_call.1} parent=1 // pred_check
      _
    $region31: #{tpu_custom_call.1} parent=1 // pred_check_branch
      %58 = sbr.rel (0) target = $region33
    $region32: #{tpu_custom_call.1} parent=1 // pred_region
      _
    $region33: #{tpu_custom_call.1} parent=1 // pred_fallthru
      _
    // Predicated region
    $region34: #{tpu_custom_call.1} parent=1 // pred_check
      _
    $region35: #{tpu_custom_call.1} parent=1 // pred_check_branch
      %60 = sbr.rel (0) target = $region37
    $region36: #{tpu_custom_call.1} parent=1 // pred_region
      _
    $region37: #{tpu_custom_call.1} parent=1 // pred_fallthru
      _
    // Predicated region
    $region38: #{tpu_custom_call.1} parent=1 // pred_check
      _
    $region39: #{tpu_custom_call.1} parent=1 // pred_check_branch
      %62 = sbr.rel (0) target = $region41
    $region40: #{tpu_custom_call.1} parent=1 // pred_region
      _
    $region41: #{tpu_custom_call.1} parent=1 // pred_fallthru
      _
    // Predicated region
    $region42: #{tpu_custom_call.1} parent=1 // pred_check
      _
    $region43: #{tpu_custom_call.1} parent=1 // pred_check_branch
      %64 = sbr.rel (0) target = $region45
    $region44: #{tpu_custom_call.1} parent=1 // pred_region
      _
    $region45: #{tpu_custom_call.1} parent=1 // pred_fallthru
      _
    // Predicated region
    $region46: #{tpu_custom_call.1} parent=1 // pred_check
      _
    $region47: #{tpu_custom_call.1} parent=1 // pred_check_branch
      %66 = sbr.rel (0) target = $region49
    $region48: #{tpu_custom_call.1} parent=1 // pred_region
      _
    $region49: #{tpu_custom_call.1} parent=1 // pred_fallthru
      _
    // Predicated region
    $region50: #{tpu_custom_call.1} parent=1 // pred_check
      _
    $region51: #{tpu_custom_call.1} parent=1 // pred_check_branch
      %68 = sbr.rel (0) target = $region53
    $region52: #{tpu_custom_call.1} parent=1 // pred_region
      _
    $region53: #{tpu_custom_call.1} parent=1 // pred_fallthru
      _
    // Predicated region
    $region54: #{tpu_custom_call.1} parent=1 // pred_check
      _
    $region55: #{tpu_custom_call.1} parent=1 // pred_check_branch
      %70 = sbr.rel (0) target = $region57
    $region56: #{tpu_custom_call.1} parent=1 // pred_region
      _
    $region57: #{tpu_custom_call.1} parent=1 // pred_fallthru
      _
    // Predicated region
    $region58: #{tpu_custom_call.1} parent=1 // pred_check
      _
    $region59: #{tpu_custom_call.1} parent=1 // pred_check_branch
      %72 = sbr.rel (0) target = $region61
    $region60: #{tpu_custom_call.1} parent=1 // pred_region
      _
    $region61: #{tpu_custom_call.1} parent=1 // pred_fallthru
      _
    // Predicated region
    $region62: #{tpu_custom_call.1} parent=1 // pred_check
      _
    $region63: #{tpu_custom_call.1} parent=1 // pred_check_branch
      %74 = sbr.rel (0) target = $region65
    $region64: #{tpu_custom_call.1} parent=1 // pred_region
      %75 = dma.done [#allocation3], 256
    $region65: #{tpu_custom_call.1} parent=1 // pred_fallthru
      _
    // Predicated region
    $region66: #{tpu_custom_call.1} parent=1 // pred_check
      _
    $region67: #{tpu_custom_call.1} parent=1 // pred_check_branch
      %77 = sbr.rel (0) target = $region69
    $region68: #{tpu_custom_call.1} parent=1 // pred_region
      %78 = dma.done [#allocation6], 256
    $region69: #{tpu_custom_call.1} parent=1 // pred_fallthru
      _
    %v79 = vld [vmem:[#allocation2] sm:$0xff]
    %v80 = vld [vmem:[#allocation2 + $0x8] sm:$0xff]
    %v81 = vld [vmem:[%s1] sm:$0x1]
    %v82 = vld [vmem:[%s7] sm:$0x1]
    %v83 = vld [vmem:[%s8] sm:$0x1]
    %vm84 = vcmask 261120
    %v85 = vsel %vm84, %v79, 0.0
    %86 = vadd.xlane.f32.xlu0 %v85
    %v87 = vpop.xlane.xlu0 %86
    %v88 = vsel %vm84, %v80, 0.0
    %89 = vadd.xlane.f32.xlu0 %v88
    %v90 = vpop.xlane.xlu0 %89
    %v91 = vrcp.pop 32.0
    %v92 = vmul.f32 %v87, %v91
    %v93 = vmul.f32 %v90, %v91
    %v94 = vsub.f32 %v79, %v92
    %v95 = vsub.f32 %v80, %v93
    %v96 = vmul.f32 %v94, %v94
    %v97 = vmul.f32 %v95, %v95
    %v98 = vsel %vm84, %v96, 0.0
    %99 = vadd.xlane.f32.xlu0 %v98
    %v100 = vpop.xlane.xlu0 %99
    %v101 = vsel %vm84, %v97, 0.0
    %102 = vadd.xlane.f32.xlu0 %v101
    %v103 = vpop.xlane.xlu0 %102
    %v104 = vrcp.pop 31.0
    %v105 = vmul.f32 %v100, %v104
    %v106 = vmul.f32 %v103, %v104
    %v107 = vrsqrt.pop %v105
    %v108 = vmul.f32 %v105, %v107
    %vm109 = vcmp.eq.f32.partialorder %v105, inf
    %v110 = vsel %vm109, %v105, %v108
    %vm111 = vcmp.eq.f32.partialorder %v105, 0.0
    %v112 = vand.u32 %v105, 2147483648
    %v113 = vsel %vm111, %v112, %v110
    %v114 = vrsqrt.pop %v106
    %v115 = vmul.f32 %v106, %v114
    %vm116 = vcmp.eq.f32.partialorder %v106, inf
    %v117 = vsel %vm116, %v106, %v115
    %vm118 = vcmp.eq.f32.partialorder %v106, 0.0
    %v119 = vand.u32 %v106, 2147483648
    %v120 = vsel %vm118, %v119, %v117
    %v121 = vadd.f32 %v113, 1e-06
    %v122 = vadd.f32 %v120, 1e-06
    %v123 = vrcp.pop %v121
    %v124 = vrcp.pop %v122
    %v126 = vlaneseq
    %v127 = vshrl.u32 %v126, 7
    %v128 = vsub.s32 0, %v127
    %v129 = vrot.slane %v82, %v128
    %v131 = vmul.f32 %v129, %v94
    %v132 = vmul.f32 %v129, %v95
    %v133 = vmul.f32 %v131, %v123
    %v134 = vmul.f32 %v132, %v124
    %v136 = vlaneseq
    %v137 = vshrl.u32 %v136, 7
    %v138 = vsub.s32 0, %v137
    %v139 = vrot.slane %v83, %v138
    %v141 = vadd.f32 %v133, %v139
    %v142 = vadd.f32 %v134, %v139
    %v143 = vld [vmem:[%s3] sm:$0xff]
    %v144 = vld [vmem:[%s3 + $0x8] sm:$0xff]
    %v145 = vld [vmem:[%s3 + $0x10] sm:$0xff]
    %v146 = vld [vmem:[%s3 + $0x18] sm:$0xff]
    %v147 = vld [vmem:[%s4] sm:$0x1]
    %v149 = vlaneseq
    %v150 = vshrl.u32 %v149, 7
    %v151 = vsub.s32 0, %v150
    %v152 = vrot.slane %v147, %v151
    %v155 = vsel %vm84, %v141, 0
    %v158 = vsel %vm84, %v142, 0
    %160 = vmatprep.subr.mxu0 0.0
    %161 = vmatpush1.msra.mxu0 %v143
    %162 = vmatprep.subr.mxu0 0.0
    %163 = vmatpush1.msra.mxu0 %v144
    %164 = vmatprep.subr.mxu0 0.0
    %165 = vmatpush1.msra.mxu0 %v145
    %166 = vmatprep.subr.mxu0 0.0
    %167 = vmatpush1.msra.mxu0 %v146
    %168 = vmatprep.subr.mxu0 0.0
    %169 = vmatpush1.msra.mxu0 0.0
    %170 = vmatprep.subr.mxu0 0.0
    %171 = vmatpush1.msra.mxu0 0.0
    %172 = vmatprep.subr.mxu0 0.0
    %173 = vmatpush1.msra.mxu0 0.0
    %174 = vmatprep.subr.mxu0 0.0
    %175 = vmatpush1.msra.mxu0 0.0
    %176 = vmatprep.subr.mxu0 0.0
    %177 = vmatpush1.msra.mxu0 0.0
    %178 = vmatprep.subr.mxu0 0.0
    %179 = vmatpush1.msra.mxu0 0.0
    %180 = vmatprep.subr.mxu0 0.0
    %181 = vmatpush1.msra.mxu0 0.0
    %182 = vmatprep.subr.mxu0 0.0
    %183 = vmatpush1.msra.mxu0 0.0
    %184 = vmatprep.subr.mxu0 0.0
    %185 = vmatpush1.msra.mxu0 0.0
    %186 = vmatprep.subr.mxu0 0.0
    %187 = vmatpush1.msra.mxu0 0.0
    %188 = vmatprep.subr.mxu0 0.0
    %189 = vmatpush1.msra.mxu0 0.0
    %190 = vmatprep.subr.mxu0 0.0
    %191 = vmatpush1.msra.mxu0 0.0
    %192 = vmatprep.subr.mxu0 0.0
    %193 = vmatpush1.msra.mxu0 0.0
    %194 = vmatprep.subr.mxu0 0.0
    %195 = vmatpush1.msra.mxu0 0.0
    %196 = vmatprep.subr.mxu0 0.0
    %197 = vmatpush1.msra.mxu0 0.0
    %198 = vmatprep.subr.mxu0 0.0
    %199 = vmatpush1.msra.mxu0 0.0
    %200 = vmatprep.subr.mxu0 0.0
    %201 = vmatpush1.msra.mxu0 0.0
    %202 = vmatprep.subr.mxu0 0.0
    %203 = vmatpush1.msra.mxu0 0.0
    %204 = vmatprep.subr.mxu0 0.0
    %205 = vmatpush1.msra.mxu0 0.0
    %206 = vmatprep.subr.mxu0 0.0
    %207 = vmatpush1.msra.mxu0 0.0
    %208 = vmatprep.subr.mxu0 0.0
    %209 = vmatpush1.msra.mxu0 0.0
    %210 = vmatprep.subr.mxu0 0.0
    %211 = vmatpush1.msra.mxu0 0.0
    %212 = vmatprep.subr.mxu0 0.0
    %213 = vmatpush1.msra.mxu0 0.0
    %214 = vmatprep.subr.mxu0 0.0
    %215 = vmatpush1.msra.mxu0 0.0
    %216 = vmatprep.subr.mxu0 0.0
    %217 = vmatpush1.msra.mxu0 0.0
    %218 = vmatprep.subr.mxu0 0.0
    %219 = vmatpush1.msra.mxu0 0.0
    %220 = vmatprep.subr.mxu0 0.0
    %221 = vmatpush1.msra.mxu0 0.0
    %222 = vmatprep.subr.mxu0 0.0
    %223 = vmatpush1.msra.mxu0 0.0
    %224 = vmatprep.mubr.f32.mxu0 0.0
    %225 = vmatmul.mubr.f32.gmra.mrb[0].mxu0 %v155
    %v226 = vpop.f32.mrb[0].mxu0
    %v227 = vadd.f32 %v152, %v226
    %v228 = vpop.f32.mrb[0].mxu0
    %229 = vmatprep.mubr.f32.mxu0 0.0
    %230 = vmatmul.mubr.f32.gmra.mrb[0].mxu0 %v158
    %v231 = vpop.f32.mrb[0].mxu0
    %v232 = vadd.f32 %v152, %v231
    %v233 = vpop.f32.mrb[0].mxu0
    %234 = vdwg.mxu0
    %v235 = vld [vmem:[#allocation5] sm:$0xff]
    %v236 = vld [vmem:[#allocation5 + $0x8] sm:$0xff]
    %vm237 = vcmp.ne.f32.partialorder %v81, 0.0
    %v238 = vsel %vm237, 0.0, -1e+09
    %v240 = vlaneseq
    %v241 = vshrl.u32 %v240, 7
    %v242 = vsub.s32 0, %v241
    %v243 = vrot.slane %v238, %v242
    %v245 = vadd.f32 %v235, %v243
    %v246 = vadd.f32 %v236, %v243
    %v247 = vld [vmem:[%s5] sm:$0xff]
    %v248 = vld [vmem:[%s5 + $0x8] sm:$0xff]
    %v249 = vld [vmem:[%s5 + $0x10] sm:$0xff]
    %v250 = vld [vmem:[%s5 + $0x18] sm:$0xff]
    %253 = vrot.lane.b32.xlu0 %v227, 96
    %v254 = vpop.permute.xlu0 %253
    %255 = vrot.lane.b32.xlu0 %v232, 96
    %v256 = vpop.permute.xlu0 %255
    %vm257 = vcmask 64512
    %v258 = vsel %vm257, %v227, 0
    %v260 = vsel %vm257, %v232, 0
    %v262 = vsel %vm257, %v254, 0
    %v264 = vsel %vm257, %v256, 0
    %266 = vmatprep.subr.mxu0 0.0
    %267 = vmatpush1.xpose.msra.mxu0 %v262
    %268 = vmatprep.subr.mxu0 0.0
    %269 = vmatpush1.xpose.msra.mxu0 %v264
    %270 = vmatprep.subr.mxu0 0.0
    %271 = vmatpush1.xpose.msra.mxu0 0.0
    %272 = vmatprep.subr.mxu0 0.0
    %273 = vmatpush1.xpose.msra.mxu0 0.0
    %274 = vmatprep.subr.mxu0 0.0
    %275 = vmatpush1.xpose.msra.mxu0 0.0
    %276 = vmatprep.subr.mxu0 0.0
    %277 = vmatpush1.xpose.msra.mxu0 0.0
    %278 = vmatprep.subr.mxu0 0.0
    %279 = vmatpush1.xpose.msra.mxu0 0.0
    %280 = vmatprep.subr.mxu0 0.0
    %281 = vmatpush1.xpose.msra.mxu0 0.0
    %282 = vmatprep.subr.mxu0 0.0
    %283 = vmatpush1.xpose.msra.mxu0 0.0
    %284 = vmatprep.subr.mxu0 0.0
    %285 = vmatpush1.xpose.msra.mxu0 0.0
    %286 = vmatprep.subr.mxu0 0.0
    %287 = vmatpush1.xpose.msra.mxu0 0.0
    %288 = vmatprep.subr.mxu0 0.0
    %289 = vmatpush1.xpose.msra.mxu0 0.0
    %290 = vmatprep.subr.mxu0 0.0
    %291 = vmatpush1.xpose.msra.mxu0 0.0
    %292 = vmatprep.subr.mxu0 0.0
    %293 = vmatpush1.xpose.msra.mxu0 0.0
    %294 = vmatprep.subr.mxu0 0.0
    %295 = vmatpush1.xpose.msra.mxu0 0.0
    %296 = vmatprep.subr.mxu0 0.0
    %297 = vmatpush1.xpose.msra.mxu0 0.0
    %298 = vmatprep.subr.mxu0 0.0
    %299 = vmatpush1.xpose.msra.mxu0 0.0
    %300 = vmatprep.subr.mxu0 0.0
    %301 = vmatpush1.xpose.msra.mxu0 0.0
    %302 = vmatprep.subr.mxu0 0.0
    %303 = vmatpush1.xpose.msra.mxu0 0.0
    %304 = vmatprep.subr.mxu0 0.0
    %305 = vmatpush1.xpose.msra.mxu0 0.0
    %306 = vmatprep.subr.mxu0 0.0
    %307 = vmatpush1.xpose.msra.mxu0 0.0
    %308 = vmatprep.subr.mxu0 0.0
    %309 = vmatpush1.xpose.msra.mxu0 0.0
    %310 = vmatprep.subr.mxu0 0.0
    %311 = vmatpush1.xpose.msra.mxu0 0.0
    %312 = vmatprep.subr.mxu0 0.0
    %313 = vmatpush1.xpose.msra.mxu0 0.0
    %314 = vmatprep.subr.mxu0 0.0
    %315 = vmatpush1.xpose.msra.mxu0 0.0
    %316 = vmatprep.subr.mxu0 0.0
    %317 = vmatpush1.xpose.msra.mxu0 0.0
    %318 = vmatprep.subr.mxu0 0.0
    %319 = vmatpush1.xpose.msra.mxu0 0.0
    %320 = vmatprep.subr.mxu0 0.0
    %321 = vmatpush1.xpose.msra.mxu0 0.0
    %322 = vmatprep.subr.mxu0 0.0
    %323 = vmatpush1.xpose.msra.mxu0 0.0
    %324 = vmatprep.subr.mxu0 0.0
    %325 = vmatpush1.xpose.msra.mxu0 0.0
    %326 = vmatprep.subr.mxu0 0.0
    %327 = vmatpush1.xpose.msra.mxu0 0.0
    %328 = vmatprep.subr.mxu0 0.0
    %329 = vmatpush1.xpose.msra.mxu0 0.0
    %330 = vmatprep.mubr.f32.mxu0 0.0
    %331 = vmatmul.mubr.f32.gmra.mrb[0].mxu0 %v258
    %v332 = vpop.f32.mrb[0].mxu0
    %v333 = vadd.f32 %v245, %v332
    %v334 = vpop.f32.mrb[0].mxu0
    %335 = vmatprep.mubr.f32.mxu0 0.0
    %336 = vmatmul.mubr.f32.gmra.mrb[0].mxu0 %v260
    %v337 = vpop.f32.mrb[0].mxu0
    %v338 = vadd.f32 %v246, %v337
    %v339 = vpop.f32.mrb[0].mxu0
    %340 = vdwg.mxu0
    %vm341 = vcmask 130048
    %v342 = vsel %vm341, %v333, -inf
    %343 = vmax.xlane.f32.xlu0 %v342
    %v344 = vpop.xlane.xlu0 %343
    %v345 = vsel %vm341, %v338, -inf
    %346 = vmax.xlane.f32.xlu0 %v345
    %v347 = vpop.xlane.xlu0 %346
    %v348 = vsub.f32 %v333, %v344
    %v349 = vsub.f32 %v338, %v347
    %v350 = vmul.f32 %v348, 1.442695
    %v351 = vpow.pop %v350
    %v352 = vmul.f32 %v349, 1.442695
    %v353 = vpow.pop %v352
    %v354 = vsel %vm341, %v351, 0.0
    %355 = vadd.xlane.f32.xlu0 %v354
    %v356 = vpop.xlane.xlu0 %355
    %v357 = vsel %vm341, %v353, 0.0
    %358 = vadd.xlane.f32.xlu0 %v357
    %v359 = vpop.xlane.xlu0 %358
    %v360 = vrcp.pop %v356
    %v361 = vrcp.pop %v359
    %v362 = vmul.f32 %v351, %v360
    %v363 = vmul.f32 %v353, %v361
    %364 = vrot.lane.b32.xlu0 %v227, 64
    %v365 = vpop.permute.xlu0 %364
    %366 = vrot.lane.b32.xlu0 %v232, 64
    %v367 = vpop.permute.xlu0 %366
    %v371 = vsel %vm341, %v362, 0
    %v374 = vsel %vm341, %v363, 0
    %376 = vmatprep.subr.mxu0 0.0
    %377 = vmatpush1.msra.mxu0 %v365
    %378 = vmatprep.subr.mxu0 0.0
    %379 = vmatpush1.msra.mxu0 %v367
    %380 = vmatprep.subr.mxu0 0.0
    %381 = vmatpush1.msra.mxu0 0.0
    %382 = vmatprep.subr.mxu0 0.0
    %383 = vmatpush1.msra.mxu0 0.0
    %384 = vmatprep.subr.mxu0 0.0
    %385 = vmatpush1.msra.mxu0 0.0
    %386 = vmatprep.subr.mxu0 0.0
    %387 = vmatpush1.msra.mxu0 0.0
    %388 = vmatprep.subr.mxu0 0.0
    %389 = vmatpush1.msra.mxu0 0.0
    %390 = vmatprep.subr.mxu0 0.0
    %391 = vmatpush1.msra.mxu0 0.0
    %392 = vmatprep.subr.mxu0 0.0
    %393 = vmatpush1.msra.mxu0 0.0
    %394 = vmatprep.subr.mxu0 0.0
    %395 = vmatpush1.msra.mxu0 0.0
    %396 = vmatprep.subr.mxu0 0.0
    %397 = vmatpush1.msra.mxu0 0.0
    %398 = vmatprep.subr.mxu0 0.0
    %399 = vmatpush1.msra.mxu0 0.0
    %400 = vmatprep.subr.mxu0 0.0
    %401 = vmatpush1.msra.mxu0 0.0
    %402 = vmatprep.subr.mxu0 0.0
    %403 = vmatpush1.msra.mxu0 0.0
    %404 = vmatprep.subr.mxu0 0.0
    %405 = vmatpush1.msra.mxu0 0.0
    %406 = vmatprep.subr.mxu0 0.0
    %407 = vmatpush1.msra.mxu0 0.0
    %408 = vmatprep.subr.mxu0 0.0
    %409 = vmatpush1.msra.mxu0 0.0
    %410 = vmatprep.subr.mxu0 0.0
    %411 = vmatpush1.msra.mxu0 0.0
    %412 = vmatprep.subr.mxu0 0.0
    %413 = vmatpush1.msra.mxu0 0.0
    %414 = vmatprep.subr.mxu0 0.0
    %415 = vmatpush1.msra.mxu0 0.0
    %416 = vmatprep.subr.mxu0 0.0
    %417 = vmatpush1.msra.mxu0 0.0
    %418 = vmatprep.subr.mxu0 0.0
    %419 = vmatpush1.msra.mxu0 0.0
    %420 = vmatprep.subr.mxu0 0.0
    %421 = vmatpush1.msra.mxu0 0.0
    %422 = vmatprep.subr.mxu0 0.0
    %423 = vmatpush1.msra.mxu0 0.0
    %424 = vmatprep.subr.mxu0 0.0
    %425 = vmatpush1.msra.mxu0 0.0
    %426 = vmatprep.subr.mxu0 0.0
    %427 = vmatpush1.msra.mxu0 0.0
    %428 = vmatprep.subr.mxu0 0.0
    %429 = vmatpush1.msra.mxu0 0.0
    %430 = vmatprep.subr.mxu0 0.0
    %431 = vmatpush1.msra.mxu0 0.0
    %432 = vmatprep.subr.mxu0 0.0
    %433 = vmatpush1.msra.mxu0 0.0
    %434 = vmatprep.subr.mxu0 0.0
    %435 = vmatpush1.msra.mxu0 0.0
    %436 = vmatprep.subr.mxu0 0.0
    %437 = vmatpush1.msra.mxu0 0.0
    %438 = vmatprep.subr.mxu0 0.0
    %439 = vmatpush1.msra.mxu0 0.0
    %440 = vmatprep.mubr.f32.mxu0 0.0
    %441 = vmatmul.mubr.f32.gmra.mrb[0].mxu0 %v371
    %v442 = vpop.f32.mrb[0].mxu0
    %v443 = vadd.f32 0.0, %v442
    %v444 = vpop.f32.mrb[0].mxu0
    %445 = vmatprep.mubr.f32.mxu0 0.0
    %446 = vmatmul.mubr.f32.gmra.mrb[0].mxu0 %v374
    %v447 = vpop.f32.mrb[0].mxu0
    %v448 = vadd.f32 0.0, %v447
    %v449 = vpop.f32.mrb[0].mxu0
    %450 = vdwg.mxu0
    %451 = vrot.lane.b32.xlu0 %v227, 120
    %v452 = vpop.permute.xlu0 %451
    %453 = vrot.lane.b32.xlu0 %v232, 120
    %v454 = vpop.permute.xlu0 %453
    %455 = vrot.lane.b32.xlu0 %v227, 88
    %v456 = vpop.permute.xlu0 %455
    %457 = vrot.lane.b32.xlu0 %v232, 88
    %v458 = vpop.permute.xlu0 %457
    %v459 = vsel %vm257, %v452, 0
    %v461 = vsel %vm257, %v454, 0
    %v463 = vsel %vm257, %v456, 0
    %v465 = vsel %vm257, %v458, 0
    %467 = vmatprep.subr.mxu0 0.0
    %468 = vmatpush1.xpose.msra.mxu0 %v463
    %469 = vmatprep.subr.mxu0 0.0
    %470 = vmatpush1.xpose.msra.mxu0 %v465
    %471 = vmatprep.subr.mxu0 0.0
    %472 = vmatpush1.xpose.msra.mxu0 0.0
    %473 = vmatprep.subr.mxu0 0.0
    %474 = vmatpush1.xpose.msra.mxu0 0.0
    %475 = vmatprep.subr.mxu0 0.0
    %476 = vmatpush1.xpose.msra.mxu0 0.0
    %477 = vmatprep.subr.mxu0 0.0
    %478 = vmatpush1.xpose.msra.mxu0 0.0
    %479 = vmatprep.subr.mxu0 0.0
    %480 = vmatpush1.xpose.msra.mxu0 0.0
    %481 = vmatprep.subr.mxu0 0.0
    %482 = vmatpush1.xpose.msra.mxu0 0.0
    %483 = vmatprep.subr.mxu0 0.0
    %484 = vmatpush1.xpose.msra.mxu0 0.0
    %485 = vmatprep.subr.mxu0 0.0
    %486 = vmatpush1.xpose.msra.mxu0 0.0
    %487 = vmatprep.subr.mxu0 0.0
    %488 = vmatpush1.xpose.msra.mxu0 0.0
    %489 = vmatprep.subr.mxu0 0.0
    %490 = vmatpush1.xpose.msra.mxu0 0.0
    %491 = vmatprep.subr.mxu0 0.0
    %492 = vmatpush1.xpose.msra.mxu0 0.0
    %493 = vmatprep.subr.mxu0 0.0
    %494 = vmatpush1.xpose.msra.mxu0 0.0
    %495 = vmatprep.subr.mxu0 0.0
    %496 = vmatpush1.xpose.msra.mxu0 0.0
    %497 = vmatprep.subr.mxu0 0.0
    %498 = vmatpush1.xpose.msra.mxu0 0.0
    %499 = vmatprep.subr.mxu0 0.0
    %500 = vmatpush1.xpose.msra.mxu0 0.0
    %501 = vmatprep.subr.mxu0 0.0
    %502 = vmatpush1.xpose.msra.mxu0 0.0
    %503 = vmatprep.subr.mxu0 0.0
    %504 = vmatpush1.xpose.msra.mxu0 0.0
    %505 = vmatprep.subr.mxu0 0.0
    %506 = vmatpush1.xpose.msra.mxu0 0.0
    %507 = vmatprep.subr.mxu0 0.0
    %508 = vmatpush1.xpose.msra.mxu0 0.0
    %509 = vmatprep.subr.mxu0 0.0
    %510 = vmatpush1.xpose.msra.mxu0 0.0
    %511 = vmatprep.subr.mxu0 0.0
    %512 = vmatpush1.xpose.msra.mxu0 0.0
    %513 = vmatprep.subr.mxu0 0.0
    %514 = vmatpush1.xpose.msra.mxu0 0.0
    %515 = vmatprep.subr.mxu0 0.0
    %516 = vmatpush1.xpose.msra.mxu0 0.0
    %517 = vmatprep.subr.mxu0 0.0
    %518 = vmatpush1.xpose.msra.mxu0 0.0
    %519 = vmatprep.subr.mxu0 0.0
    %520 = vmatpush1.xpose.msra.mxu0 0.0
    %521 = vmatprep.subr.mxu0 0.0
    %522 = vmatpush1.xpose.msra.mxu0 0.0
    %523 = vmatprep.subr.mxu0 0.0
    %524 = vmatpush1.xpose.msra.mxu0 0.0
    %525 = vmatprep.subr.mxu0 0.0
    %526 = vmatpush1.xpose.msra.mxu0 0.0
    %527 = vmatprep.subr.mxu0 0.0
    %528 = vmatpush1.xpose.msra.mxu0 0.0
    %529 = vmatprep.subr.mxu0 0.0
    %530 = vmatpush1.xpose.msra.mxu0 0.0
    %531 = vmatprep.mubr.f32.mxu0 0.0
    %532 = vmatmul.mubr.f32.gmra.mrb[0].mxu0 %v459
    %v533 = vpop.f32.mrb[0].mxu0
    %v534 = vadd.f32 %v245, %v533
    %v535 = vpop.f32.mrb[0].mxu0
    %536 = vmatprep.mubr.f32.mxu0 0.0
    %537 = vmatmul.mubr.f32.gmra.mrb[0].mxu0 %v461
    %v538 = vpop.f32.mrb[0].mxu0
    %v539 = vadd.f32 %v246, %v538
    %v540 = vpop.f32.mrb[0].mxu0
    %541 = vdwg.mxu0
    %v542 = vsel %vm341, %v534, -inf
    %543 = vmax.xlane.f32.xlu0 %v542
    %v544 = vpop.xlane.xlu0 %543
    %v545 = vsel %vm341, %v539, -inf
    %546 = vmax.xlane.f32.xlu0 %v545
    %v547 = vpop.xlane.xlu0 %546
    %v548 = vsub.f32 %v534, %v544
    %v549 = vsub.f32 %v539, %v547
    %v550 = vmul.f32 %v548, 1.442695
    %v551 = vpow.pop %v550
    %v552 = vmul.f32 %v549, 1.442695
    %v553 = vpow.pop %v552
    %v554 = vsel %vm341, %v551, 0.0
    %555 = vadd.xlane.f32.xlu0 %v554
    %v556 = vpop.xlane.xlu0 %555
    %v557 = vsel %vm341, %v553, 0.0
    %558 = vadd.xlane.f32.xlu0 %v557
    %v559 = vpop.xlane.xlu0 %558
    %v560 = vrcp.pop %v556
    %v561 = vrcp.pop %v559
    %v562 = vmul.f32 %v551, %v560
    %v563 = vmul.f32 %v553, %v561
    %564 = vrot.lane.b32.xlu0 %v227, 56
    %v565 = vpop.permute.xlu0 %564
    %566 = vrot.lane.b32.xlu0 %v232, 56
    %v567 = vpop.permute.xlu0 %566
    %v571 = vsel %vm341, %v562, 0
    %v574 = vsel %vm341, %v563, 0
    %576 = vmatprep.subr.mxu0 0.0
    %577 = vmatpush1.msra.mxu0 %v565
    %578 = vmatprep.subr.mxu0 0.0
    %579 = vmatpush1.msra.mxu0 %v567
    %580 = vmatprep.subr.mxu0 0.0
    %581 = vmatpush1.msra.mxu0 0.0
    %582 = vmatprep.subr.mxu0 0.0
    %583 = vmatpush1.msra.mxu0 0.0
    %584 = vmatprep.subr.mxu0 0.0
    %585 = vmatpush1.msra.mxu0 0.0
    %586 = vmatprep.subr.mxu0 0.0
    %587 = vmatpush1.msra.mxu0 0.0
    %588 = vmatprep.subr.mxu0 0.0
    %589 = vmatpush1.msra.mxu0 0.0
    %590 = vmatprep.subr.mxu0 0.0
    %591 = vmatpush1.msra.mxu0 0.0
    %592 = vmatprep.subr.mxu0 0.0
    %593 = vmatpush1.msra.mxu0 0.0
    %594 = vmatprep.subr.mxu0 0.0
    %595 = vmatpush1.msra.mxu0 0.0
    %596 = vmatprep.subr.mxu0 0.0
    %597 = vmatpush1.msra.mxu0 0.0
    %598 = vmatprep.subr.mxu0 0.0
    %599 = vmatpush1.msra.mxu0 0.0
    %600 = vmatprep.subr.mxu0 0.0
    %601 = vmatpush1.msra.mxu0 0.0
    %602 = vmatprep.subr.mxu0 0.0
    %603 = vmatpush1.msra.mxu0 0.0
    %604 = vmatprep.subr.mxu0 0.0
    %605 = vmatpush1.msra.mxu0 0.0
    %606 = vmatprep.subr.mxu0 0.0
    %607 = vmatpush1.msra.mxu0 0.0
    %608 = vmatprep.subr.mxu0 0.0
    %609 = vmatpush1.msra.mxu0 0.0
    %610 = vmatprep.subr.mxu0 0.0
    %611 = vmatpush1.msra.mxu0 0.0
    %612 = vmatprep.subr.mxu0 0.0
    %613 = vmatpush1.msra.mxu0 0.0
    %614 = vmatprep.subr.mxu0 0.0
    %615 = vmatpush1.msra.mxu0 0.0
    %616 = vmatprep.subr.mxu0 0.0
    %617 = vmatpush1.msra.mxu0 0.0
    %618 = vmatprep.subr.mxu0 0.0
    %619 = vmatpush1.msra.mxu0 0.0
    %620 = vmatprep.subr.mxu0 0.0
    %621 = vmatpush1.msra.mxu0 0.0
    %622 = vmatprep.subr.mxu0 0.0
    %623 = vmatpush1.msra.mxu0 0.0
    %624 = vmatprep.subr.mxu0 0.0
    %625 = vmatpush1.msra.mxu0 0.0
    %626 = vmatprep.subr.mxu0 0.0
    %627 = vmatpush1.msra.mxu0 0.0
    %628 = vmatprep.subr.mxu0 0.0
    %629 = vmatpush1.msra.mxu0 0.0
    %630 = vmatprep.subr.mxu0 0.0
    %631 = vmatpush1.msra.mxu0 0.0
    %632 = vmatprep.subr.mxu0 0.0
    %633 = vmatpush1.msra.mxu0 0.0
    %634 = vmatprep.subr.mxu0 0.0
    %635 = vmatpush1.msra.mxu0 0.0
    %636 = vmatprep.subr.mxu0 0.0
    %637 = vmatpush1.msra.mxu0 0.0
    %638 = vmatprep.subr.mxu0 0.0
    %639 = vmatpush1.msra.mxu0 0.0
    %640 = vmatprep.mubr.f32.mxu0 0.0
    %641 = vmatmul.mubr.f32.gmra.mrb[0].mxu0 %v571
    %v642 = vpop.f32.mrb[0].mxu0
    %v643 = vadd.f32 0.0, %v642
    %v644 = vpop.f32.mrb[0].mxu0
    %645 = vmatprep.mubr.f32.mxu0 0.0
    %646 = vmatmul.mubr.f32.gmra.mrb[0].mxu0 %v574
    %v647 = vpop.f32.mrb[0].mxu0
    %v648 = vadd.f32 0.0, %v647
    %v649 = vpop.f32.mrb[0].mxu0
    %650 = vdwg.mxu0
    %v652 = vsel %vm257, %v643, 0
    %v655 = vsel %vm257, %v648, 0
    %657 = vmatprep.subr.mxu0 0.0
    %658 = vmatpush1.msra.mxu0 %v248
    %659 = vmatprep.subr.mxu0 0.0
    %660 = vmatpush1.msra.mxu0 0.0
    %661 = vmatprep.subr.mxu0 0.0
    %662 = vmatpush1.msra.mxu0 0.0
    %663 = vmatprep.subr.mxu0 0.0
    %664 = vmatpush1.msra.mxu0 0.0
    %665 = vmatprep.subr.mxu0 0.0
    %666 = vmatpush1.msra.mxu0 0.0
    %667 = vmatprep.subr.mxu0 0.0
    %668 = vmatpush1.msra.mxu0 0.0
    %669 = vmatprep.subr.mxu0 0.0
    %670 = vmatpush1.msra.mxu0 0.0
    %671 = vmatprep.subr.mxu0 0.0
    %672 = vmatpush1.msra.mxu0 0.0
    %673 = vmatprep.subr.mxu0 0.0
    %674 = vmatpush1.msra.mxu0 0.0
    %675 = vmatprep.subr.mxu0 0.0
    %676 = vmatpush1.msra.mxu0 0.0
    %677 = vmatprep.subr.mxu0 0.0
    %678 = vmatpush1.msra.mxu0 0.0
    %679 = vmatprep.subr.mxu0 0.0
    %680 = vmatpush1.msra.mxu0 0.0
    %681 = vmatprep.subr.mxu0 0.0
    %682 = vmatpush1.msra.mxu0 0.0
    %683 = vmatprep.subr.mxu0 0.0
    %684 = vmatpush1.msra.mxu0 0.0
    %685 = vmatprep.subr.mxu0 0.0
    %686 = vmatpush1.msra.mxu0 0.0
    %687 = vmatprep.subr.mxu0 0.0
    %688 = vmatpush1.msra.mxu0 0.0
    %689 = vmatprep.subr.mxu0 0.0
    %690 = vmatpush1.msra.mxu0 0.0
    %691 = vmatprep.subr.mxu0 0.0
    %692 = vmatpush1.msra.mxu0 0.0
    %693 = vmatprep.subr.mxu0 0.0
    %694 = vmatpush1.msra.mxu0 0.0
    %695 = vmatprep.subr.mxu0 0.0
    %696 = vmatpush1.msra.mxu0 0.0
    %697 = vmatprep.subr.mxu0 0.0
    %698 = vmatpush1.msra.mxu0 0.0
    %699 = vmatprep.subr.mxu0 0.0
    %700 = vmatpush1.msra.mxu0 0.0
    %701 = vmatprep.subr.mxu0 0.0
    %702 = vmatpush1.msra.mxu0 0.0
    %703 = vmatprep.subr.mxu0 0.0
    %704 = vmatpush1.msra.mxu0 0.0
    %705 = vmatprep.subr.mxu0 0.0
    %706 = vmatpush1.msra.mxu0 0.0
    %707 = vmatprep.subr.mxu0 0.0
    %708 = vmatpush1.msra.mxu0 0.0
    %709 = vmatprep.subr.mxu0 0.0
    %710 = vmatpush1.msra.mxu0 0.0
    %711 = vmatprep.subr.mxu0 0.0
    %712 = vmatpush1.msra.mxu0 0.0
    %713 = vmatprep.subr.mxu0 0.0
    %714 = vmatpush1.msra.mxu0 0.0
    %715 = vmatprep.subr.mxu0 0.0
    %716 = vmatpush1.msra.mxu0 0.0
    %717 = vmatprep.subr.mxu0 0.0
    %718 = vmatpush1.msra.mxu0 0.0
    %719 = vmatprep.subr.mxu0 0.0
    %720 = vmatpush1.msra.mxu0 0.0
    %721 = vmatprep.mubr.f32.mxu0 0.0
    %722 = vmatmul.mubr.f32.gmra.mrb[0].mxu0 %v652
    %v723 = vpop.f32.mrb[0].mxu0
    %v724 = vadd.f32 0.0, %v723
    %v725 = vpop.f32.mrb[0].mxu0
    %726 = vmatprep.mubr.f32.mxu0 0.0
    %727 = vmatmul.mubr.f32.gmra.mrb[0].mxu0 %v655
    %v728 = vpop.f32.mrb[0].mxu0
    %v729 = vadd.f32 0.0, %v728
    %v730 = vpop.f32.mrb[0].mxu0
    %731 = vdwg.mxu0
    %v733 = vsel %vm257, %v443, 0
    %v736 = vsel %vm257, %v448, 0
    %738 = vmatprep.subr.mxu0 0.0
    %739 = vmatpush1.msra.mxu0 %v247
    %740 = vmatprep.subr.mxu0 0.0
    %741 = vmatpush1.msra.mxu0 0.0
    %742 = vmatprep.subr.mxu0 0.0
    %743 = vmatpush1.msra.mxu0 0.0
    %744 = vmatprep.subr.mxu0 0.0
    %745 = vmatpush1.msra.mxu0 0.0
    %746 = vmatprep.subr.mxu0 0.0
    %747 = vmatpush1.msra.mxu0 0.0
    %748 = vmatprep.subr.mxu0 0.0
    %749 = vmatpush1.msra.mxu0 0.0
    %750 = vmatprep.subr.mxu0 0.0
    %751 = vmatpush1.msra.mxu0 0.0
    %752 = vmatprep.subr.mxu0 0.0
    %753 = vmatpush1.msra.mxu0 0.0
    %754 = vmatprep.subr.mxu0 0.0
    %755 = vmatpush1.msra.mxu0 0.0
    %756 = vmatprep.subr.mxu0 0.0
    %757 = vmatpush1.msra.mxu0 0.0
    %758 = vmatprep.subr.mxu0 0.0
    %759 = vmatpush1.msra.mxu0 0.0
    %760 = vmatprep.subr.mxu0 0.0
    %761 = vmatpush1.msra.mxu0 0.0
    %762 = vmatprep.subr.mxu0 0.0
    %763 = vmatpush1.msra.mxu0 0.0
    %764 = vmatprep.subr.mxu0 0.0
    %765 = vmatpush1.msra.mxu0 0.0
    %766 = vmatprep.subr.mxu0 0.0
    %767 = vmatpush1.msra.mxu0 0.0
    %768 = vmatprep.subr.mxu0 0.0
    %769 = vmatpush1.msra.mxu0 0.0
    %770 = vmatprep.subr.mxu0 0.0
    %771 = vmatpush1.msra.mxu0 0.0
    %772 = vmatprep.subr.mxu0 0.0
    %773 = vmatpush1.msra.mxu0 0.0
    %774 = vmatprep.subr.mxu0 0.0
    %775 = vmatpush1.msra.mxu0 0.0
    %776 = vmatprep.subr.mxu0 0.0
    %777 = vmatpush1.msra.mxu0 0.0
    %778 = vmatprep.subr.mxu0 0.0
    %779 = vmatpush1.msra.mxu0 0.0
    %780 = vmatprep.subr.mxu0 0.0
    %781 = vmatpush1.msra.mxu0 0.0
    %782 = vmatprep.subr.mxu0 0.0
    %783 = vmatpush1.msra.mxu0 0.0
    %784 = vmatprep.subr.mxu0 0.0
    %785 = vmatpush1.msra.mxu0 0.0
    %786 = vmatprep.subr.mxu0 0.0
    %787 = vmatpush1.msra.mxu0 0.0
    %788 = vmatprep.subr.mxu0 0.0
    %789 = vmatpush1.msra.mxu0 0.0
    %790 = vmatprep.subr.mxu0 0.0
    %791 = vmatpush1.msra.mxu0 0.0
    %792 = vmatprep.subr.mxu0 0.0
    %793 = vmatpush1.msra.mxu0 0.0
    %794 = vmatprep.subr.mxu0 0.0
    %795 = vmatpush1.msra.mxu0 0.0
    %796 = vmatprep.subr.mxu0 0.0
    %797 = vmatpush1.msra.mxu0 0.0
    %798 = vmatprep.subr.mxu0 0.0
    %799 = vmatpush1.msra.mxu0 0.0
    %800 = vmatprep.subr.mxu0 0.0
    %801 = vmatpush1.msra.mxu0 0.0
    %802 = vmatprep.mubr.f32.mxu0 0.0
    %803 = vmatmul.mubr.f32.gmra.mrb[0].mxu0 %v733
    %v804 = vpop.f32.mrb[0].mxu0
    %v805 = vadd.f32 %v724, %v804
    %v806 = vpop.f32.mrb[0].mxu0
    %807 = vmatprep.mubr.f32.mxu0 0.0
    %808 = vmatmul.mubr.f32.gmra.mrb[0].mxu0 %v736
    %v809 = vpop.f32.mrb[0].mxu0
    %v810 = vadd.f32 %v729, %v809
    %v811 = vpop.f32.mrb[0].mxu0
    %812 = vdwg.mxu0
    %813 = vrot.lane.b32.xlu0 %v227, 112
    %v814 = vpop.permute.xlu0 %813
    %815 = vrot.lane.b32.xlu0 %v232, 112
    %v816 = vpop.permute.xlu0 %815
    %817 = vrot.lane.b32.xlu0 %v227, 80
    %v818 = vpop.permute.xlu0 %817
    %819 = vrot.lane.b32.xlu0 %v232, 80
    %v820 = vpop.permute.xlu0 %819
    %v821 = vsel %vm257, %v814, 0
    %v823 = vsel %vm257, %v816, 0
    %v825 = vsel %vm257, %v818, 0
    %v827 = vsel %vm257, %v820, 0
    %829 = vmatprep.subr.mxu0 0.0
    %830 = vmatpush1.xpose.msra.mxu0 %v825
    %831 = vmatprep.subr.mxu0 0.0
    %832 = vmatpush1.xpose.msra.mxu0 %v827
    %833 = vmatprep.subr.mxu0 0.0
    %834 = vmatpush1.xpose.msra.mxu0 0.0
    %835 = vmatprep.subr.mxu0 0.0
    %836 = vmatpush1.xpose.msra.mxu0 0.0
    %837 = vmatprep.subr.mxu0 0.0
    %838 = vmatpush1.xpose.msra.mxu0 0.0
    %839 = vmatprep.subr.mxu0 0.0
    %840 = vmatpush1.xpose.msra.mxu0 0.0
    %841 = vmatprep.subr.mxu0 0.0
    %842 = vmatpush1.xpose.msra.mxu0 0.0
    %843 = vmatprep.subr.mxu0 0.0
    %844 = vmatpush1.xpose.msra.mxu0 0.0
    %845 = vmatprep.subr.mxu0 0.0
    %846 = vmatpush1.xpose.msra.mxu0 0.0
    %847 = vmatprep.subr.mxu0 0.0
    %848 = vmatpush1.xpose.msra.mxu0 0.0
    %849 = vmatprep.subr.mxu0 0.0
    %850 = vmatpush1.xpose.msra.mxu0 0.0
    %851 = vmatprep.subr.mxu0 0.0
    %852 = vmatpush1.xpose.msra.mxu0 0.0
    %853 = vmatprep.subr.mxu0 0.0
    %854 = vmatpush1.xpose.msra.mxu0 0.0
    %855 = vmatprep.subr.mxu0 0.0
    %856 = vmatpush1.xpose.msra.mxu0 0.0
    %857 = vmatprep.subr.mxu0 0.0
    %858 = vmatpush1.xpose.msra.mxu0 0.0
    %859 = vmatprep.subr.mxu0 0.0
    %860 = vmatpush1.xpose.msra.mxu0 0.0
    %861 = vmatprep.subr.mxu0 0.0
    %862 = vmatpush1.xpose.msra.mxu0 0.0
    %863 = vmatprep.subr.mxu0 0.0
    %864 = vmatpush1.xpose.msra.mxu0 0.0
    %865 = vmatprep.subr.mxu0 0.0
    %866 = vmatpush1.xpose.msra.mxu0 0.0
    %867 = vmatprep.subr.mxu0 0.0
    %868 = vmatpush1.xpose.msra.mxu0 0.0
    %869 = vmatprep.subr.mxu0 0.0
    %870 = vmatpush1.xpose.msra.mxu0 0.0
    %871 = vmatprep.subr.mxu0 0.0
    %872 = vmatpush1.xpose.msra.mxu0 0.0
    %873 = vmatprep.subr.mxu0 0.0
    %874 = vmatpush1.xpose.msra.mxu0 0.0
    %875 = vmatprep.subr.mxu0 0.0
    %876 = vmatpush1.xpose.msra.mxu0 0.0
    %877 = vmatprep.subr.mxu0 0.0
    %878 = vmatpush1.xpose.msra.mxu0 0.0
    %879 = vmatprep.subr.mxu0 0.0
    %880 = vmatpush1.xpose.msra.mxu0 0.0
    %881 = vmatprep.subr.mxu0 0.0
    %882 = vmatpush1.xpose.msra.mxu0 0.0
    %883 = vmatprep.subr.mxu0 0.0
    %884 = vmatpush1.xpose.msra.mxu0 0.0
    %885 = vmatprep.subr.mxu0 0.0
    %886 = vmatpush1.xpose.msra.mxu0 0.0
    %887 = vmatprep.subr.mxu0 0.0
    %888 = vmatpush1.xpose.msra.mxu0 0.0
    %889 = vmatprep.subr.mxu0 0.0
    %890 = vmatpush1.xpose.msra.mxu0 0.0
    %891 = vmatprep.subr.mxu0 0.0
    %892 = vmatpush1.xpose.msra.mxu0 0.0
    %893 = vmatprep.mubr.f32.mxu0 0.0
    %894 = vmatmul.mubr.f32.gmra.mrb[0].mxu0 %v821
    %v895 = vpop.f32.mrb[0].mxu0
    %v896 = vadd.f32 %v245, %v895
    %v897 = vpop.f32.mrb[0].mxu0
    %898 = vmatprep.mubr.f32.mxu0 0.0
    %899 = vmatmul.mubr.f32.gmra.mrb[0].mxu0 %v823
    %v900 = vpop.f32.mrb[0].mxu0
    %v901 = vadd.f32 %v246, %v900
    %v902 = vpop.f32.mrb[0].mxu0
    %903 = vdwg.mxu0
    %v904 = vsel %vm341, %v896, -inf
    %905 = vmax.xlane.f32.xlu0 %v904
    %v906 = vpop.xlane.xlu0 %905
    %v907 = vsel %vm341, %v901, -inf
    %908 = vmax.xlane.f32.xlu0 %v907
    %v909 = vpop.xlane.xlu0 %908
    %v910 = vsub.f32 %v896, %v906
    %v911 = vsub.f32 %v901, %v909
    %v912 = vmul.f32 %v910, 1.442695
    %v913 = vpow.pop %v912
    %v914 = vmul.f32 %v911, 1.442695
    %v915 = vpow.pop %v914
    %v916 = vsel %vm341, %v913, 0.0
    %917 = vadd.xlane.f32.xlu0 %v916
    %v918 = vpop.xlane.xlu0 %917
    %v919 = vsel %vm341, %v915, 0.0
    %920 = vadd.xlane.f32.xlu0 %v919
    %v921 = vpop.xlane.xlu0 %920
    %v922 = vrcp.pop %v918
    %v923 = vrcp.pop %v921
    %v924 = vmul.f32 %v913, %v922
    %v925 = vmul.f32 %v915, %v923
    %926 = vrot.lane.b32.xlu0 %v227, 48
    %v927 = vpop.permute.xlu0 %926
    %928 = vrot.lane.b32.xlu0 %v232, 48
    %v929 = vpop.permute.xlu0 %928
    %v933 = vsel %vm341, %v924, 0
    %v936 = vsel %vm341, %v925, 0
    %938 = vmatprep.subr.mxu0 0.0
    %939 = vmatpush1.msra.mxu0 %v927
    %940 = vmatprep.subr.mxu0 0.0
    %941 = vmatpush1.msra.mxu0 %v929
    %942 = vmatprep.subr.mxu0 0.0
    %943 = vmatpush1.msra.mxu0 0.0
    %944 = vmatprep.subr.mxu0 0.0
    %945 = vmatpush1.msra.mxu0 0.0
    %946 = vmatprep.subr.mxu0 0.0
    %947 = vmatpush1.msra.mxu0 0.0
    %948 = vmatprep.subr.mxu0 0.0
    %949 = vmatpush1.msra.mxu0 0.0
    %950 = vmatprep.subr.mxu0 0.0
    %951 = vmatpush1.msra.mxu0 0.0
    %952 = vmatprep.subr.mxu0 0.0
    %953 = vmatpush1.msra.mxu0 0.0
    %954 = vmatprep.subr.mxu0 0.0
    %955 = vmatpush1.msra.mxu0 0.0
    %956 = vmatprep.subr.mxu0 0.0
    %957 = vmatpush1.msra.mxu0 0.0
    %958 = vmatprep.subr.mxu0 0.0
    %959 = vmatpush1.msra.mxu0 0.0
    %960 = vmatprep.subr.mxu0 0.0
    %961 = vmatpush1.msra.mxu0 0.0
    %962 = vmatprep.subr.mxu0 0.0
    %963 = vmatpush1.msra.mxu0 0.0
    %964 = vmatprep.subr.mxu0 0.0
    %965 = vmatpush1.msra.mxu0 0.0
    %966 = vmatprep.subr.mxu0 0.0
    %967 = vmatpush1.msra.mxu0 0.0
    %968 = vmatprep.subr.mxu0 0.0
    %969 = vmatpush1.msra.mxu0 0.0
    %970 = vmatprep.subr.mxu0 0.0
    %971 = vmatpush1.msra.mxu0 0.0
    %972 = vmatprep.subr.mxu0 0.0
    %973 = vmatpush1.msra.mxu0 0.0
    %974 = vmatprep.subr.mxu0 0.0
    %975 = vmatpush1.msra.mxu0 0.0
    %976 = vmatprep.subr.mxu0 0.0
    %977 = vmatpush1.msra.mxu0 0.0
    %978 = vmatprep.subr.mxu0 0.0
    %979 = vmatpush1.msra.mxu0 0.0
    %980 = vmatprep.subr.mxu0 0.0
    %981 = vmatpush1.msra.mxu0 0.0
    %982 = vmatprep.subr.mxu0 0.0
    %983 = vmatpush1.msra.mxu0 0.0
    %984 = vmatprep.subr.mxu0 0.0
    %985 = vmatpush1.msra.mxu0 0.0
    %986 = vmatprep.subr.mxu0 0.0
    %987 = vmatpush1.msra.mxu0 0.0
    %988 = vmatprep.subr.mxu0 0.0
    %989 = vmatpush1.msra.mxu0 0.0
    %990 = vmatprep.subr.mxu0 0.0
    %991 = vmatpush1.msra.mxu0 0.0
    %992 = vmatprep.subr.mxu0 0.0
    %993 = vmatpush1.msra.mxu0 0.0
    %994 = vmatprep.subr.mxu0 0.0
    %995 = vmatpush1.msra.mxu0 0.0
    %996 = vmatprep.subr.mxu0 0.0
    %997 = vmatpush1.msra.mxu0 0.0
    %998 = vmatprep.subr.mxu0 0.0
    %999 = vmatpush1.msra.mxu0 0.0
    %1000 = vmatprep.subr.mxu0 0.0
    %1001 = vmatpush1.msra.mxu0 0.0
    %1002 = vmatprep.mubr.f32.mxu0 0.0
    %1003 = vmatmul.mubr.f32.gmra.mrb[0].mxu0 %v933
    %v1004 = vpop.f32.mrb[0].mxu0
    %v1005 = vadd.f32 0.0, %v1004
    %v1006 = vpop.f32.mrb[0].mxu0
    %1007 = vmatprep.mubr.f32.mxu0 0.0
    %1008 = vmatmul.mubr.f32.gmra.mrb[0].mxu0 %v936
    %v1009 = vpop.f32.mrb[0].mxu0
    %v1010 = vadd.f32 0.0, %v1009
    %v1011 = vpop.f32.mrb[0].mxu0
    %1012 = vdwg.mxu0
    %v1014 = vsel %vm257, %v1005, 0
    %v1017 = vsel %vm257, %v1010, 0
    %1019 = vmatprep.subr.mxu0 0.0
    %1020 = vmatpush1.msra.mxu0 %v249
    %1021 = vmatprep.subr.mxu0 0.0
    %1022 = vmatpush1.msra.mxu0 0.0
    %1023 = vmatprep.subr.mxu0 0.0
    %1024 = vmatpush1.msra.mxu0 0.0
    %1025 = vmatprep.subr.mxu0 0.0
    %1026 = vmatpush1.msra.mxu0 0.0
    %1027 = vmatprep.subr.mxu0 0.0
    %1028 = vmatpush1.msra.mxu0 0.0
    %1029 = vmatprep.subr.mxu0 0.0
    %1030 = vmatpush1.msra.mxu0 0.0
    %1031 = vmatprep.subr.mxu0 0.0
    %1032 = vmatpush1.msra.mxu0 0.0
    %1033 = vmatprep.subr.mxu0 0.0
    %1034 = vmatpush1.msra.mxu0 0.0
    %1035 = vmatprep.subr.mxu0 0.0
    %1036 = vmatpush1.msra.mxu0 0.0
    %1037 = vmatprep.subr.mxu0 0.0
    %1038 = vmatpush1.msra.mxu0 0.0
    %1039 = vmatprep.subr.mxu0 0.0
    %1040 = vmatpush1.msra.mxu0 0.0
    %1041 = vmatprep.subr.mxu0 0.0
    %1042 = vmatpush1.msra.mxu0 0.0
    %1043 = vmatprep.subr.mxu0 0.0
    %1044 = vmatpush1.msra.mxu0 0.0
    %1045 = vmatprep.subr.mxu0 0.0
    %1046 = vmatpush1.msra.mxu0 0.0
    %1047 = vmatprep.subr.mxu0 0.0
    %1048 = vmatpush1.msra.mxu0 0.0
    %1049 = vmatprep.subr.mxu0 0.0
    %1050 = vmatpush1.msra.mxu0 0.0
    %1051 = vmatprep.subr.mxu0 0.0
    %1052 = vmatpush1.msra.mxu0 0.0
    %1053 = vmatprep.subr.mxu0 0.0
    %1054 = vmatpush1.msra.mxu0 0.0
    %1055 = vmatprep.subr.mxu0 0.0
    %1056 = vmatpush1.msra.mxu0 0.0
    %1057 = vmatprep.subr.mxu0 0.0
    %1058 = vmatpush1.msra.mxu0 0.0
    %1059 = vmatprep.subr.mxu0 0.0
    %1060 = vmatpush1.msra.mxu0 0.0
    %1061 = vmatprep.subr.mxu0 0.0
    %1062 = vmatpush1.msra.mxu0 0.0
    %1063 = vmatprep.subr.mxu0 0.0
    %1064 = vmatpush1.msra.mxu0 0.0
    %1065 = vmatprep.subr.mxu0 0.0
    %1066 = vmatpush1.msra.mxu0 0.0
    %1067 = vmatprep.subr.mxu0 0.0
    %1068 = vmatpush1.msra.mxu0 0.0
    %1069 = vmatprep.subr.mxu0 0.0
    %1070 = vmatpush1.msra.mxu0 0.0
    %1071 = vmatprep.subr.mxu0 0.0
    %1072 = vmatpush1.msra.mxu0 0.0
    %1073 = vmatprep.subr.mxu0 0.0
    %1074 = vmatpush1.msra.mxu0 0.0
    %1075 = vmatprep.subr.mxu0 0.0
    %1076 = vmatpush1.msra.mxu0 0.0
    %1077 = vmatprep.subr.mxu0 0.0
    %1078 = vmatpush1.msra.mxu0 0.0
    %1079 = vmatprep.subr.mxu0 0.0
    %1080 = vmatpush1.msra.mxu0 0.0
    %1081 = vmatprep.subr.mxu0 0.0
    %1082 = vmatpush1.msra.mxu0 0.0
    %1083 = vmatprep.mubr.f32.mxu0 0.0
    %1084 = vmatmul.mubr.f32.gmra.mrb[0].mxu0 %v1014
    %v1085 = vpop.f32.mrb[0].mxu0
    %v1086 = vadd.f32 0.0, %v1085
    %v1087 = vpop.f32.mrb[0].mxu0
    %1088 = vmatprep.mubr.f32.mxu0 0.0
    %1089 = vmatmul.mubr.f32.gmra.mrb[0].mxu0 %v1017
    %v1090 = vpop.f32.mrb[0].mxu0
    %v1091 = vadd.f32 0.0, %v1090
    %v1092 = vpop.f32.mrb[0].mxu0
    %1093 = vdwg.mxu0
    %v1094 = vadd.f32 %v805, %v1086
    %v1095 = vadd.f32 %v810, %v1091
    %1096 = vrot.lane.b32.xlu0 %v227, 104
    %v1097 = vpop.permute.xlu0 %1096
    %1098 = vrot.lane.b32.xlu0 %v232, 104
    %v1099 = vpop.permute.xlu0 %1098
    %1100 = vrot.lane.b32.xlu0 %v227, 72
    %v1101 = vpop.permute.xlu0 %1100
    %1102 = vrot.lane.b32.xlu0 %v232, 72
    %v1103 = vpop.permute.xlu0 %1102
    %v1104 = vsel %vm257, %v1097, 0
    %v1106 = vsel %vm257, %v1099, 0
    %v1108 = vsel %vm257, %v1101, 0
    %v1110 = vsel %vm257, %v1103, 0
    %1112 = vmatprep.subr.mxu0 0.0
    %1113 = vmatpush1.xpose.msra.mxu0 %v1108
    %1114 = vmatprep.subr.mxu0 0.0
    %1115 = vmatpush1.xpose.msra.mxu0 %v1110
    %1116 = vmatprep.subr.mxu0 0.0
    %1117 = vmatpush1.xpose.msra.mxu0 0.0
    %1118 = vmatprep.subr.mxu0 0.0
    %1119 = vmatpush1.xpose.msra.mxu0 0.0
    %1120 = vmatprep.subr.mxu0 0.0
    %1121 = vmatpush1.xpose.msra.mxu0 0.0
    %1122 = vmatprep.subr.mxu0 0.0
    %1123 = vmatpush1.xpose.msra.mxu0 0.0
    %1124 = vmatprep.subr.mxu0 0.0
    %1125 = vmatpush1.xpose.msra.mxu0 0.0
    %1126 = vmatprep.subr.mxu0 0.0
    %1127 = vmatpush1.xpose.msra.mxu0 0.0
    %1128 = vmatprep.subr.mxu0 0.0
    %1129 = vmatpush1.xpose.msra.mxu0 0.0
    %1130 = vmatprep.subr.mxu0 0.0
    %1131 = vmatpush1.xpose.msra.mxu0 0.0
    %1132 = vmatprep.subr.mxu0 0.0
    %1133 = vmatpush1.xpose.msra.mxu0 0.0
    %1134 = vmatprep.subr.mxu0 0.0
    %1135 = vmatpush1.xpose.msra.mxu0 0.0
    %1136 = vmatprep.subr.mxu0 0.0
    %1137 = vmatpush1.xpose.msra.mxu0 0.0
    %1138 = vmatprep.subr.mxu0 0.0
    %1139 = vmatpush1.xpose.msra.mxu0 0.0
    %1140 = vmatprep.subr.mxu0 0.0
    %1141 = vmatpush1.xpose.msra.mxu0 0.0
    %1142 = vmatprep.subr.mxu0 0.0
    %1143 = vmatpush1.xpose.msra.mxu0 0.0
    %1144 = vmatprep.subr.mxu0 0.0
    %1145 = vmatpush1.xpose.msra.mxu0 0.0
    %1146 = vmatprep.subr.mxu0 0.0
    %1147 = vmatpush1.xpose.msra.mxu0 0.0
    %1148 = vmatprep.subr.mxu0 0.0
    %1149 = vmatpush1.xpose.msra.mxu0 0.0
    %1150 = vmatprep.subr.mxu0 0.0
    %1151 = vmatpush1.xpose.msra.mxu0 0.0
    %1152 = vmatprep.subr.mxu0 0.0
    %1153 = vmatpush1.xpose.msra.mxu0 0.0
    %1154 = vmatprep.subr.mxu0 0.0
    %1155 = vmatpush1.xpose.msra.mxu0 0.0
    %1156 = vmatprep.subr.mxu0 0.0
    %1157 = vmatpush1.xpose.msra.mxu0 0.0
    %1158 = vmatprep.subr.mxu0 0.0
    %1159 = vmatpush1.xpose.msra.mxu0 0.0
    %1160 = vmatprep.subr.mxu0 0.0
    %1161 = vmatpush1.xpose.msra.mxu0 0.0
    %1162 = vmatprep.subr.mxu0 0.0
    %1163 = vmatpush1.xpose.msra.mxu0 0.0
    %1164 = vmatprep.subr.mxu0 0.0
    %1165 = vmatpush1.xpose.msra.mxu0 0.0
    %1166 = vmatprep.subr.mxu0 0.0
    %1167 = vmatpush1.xpose.msra.mxu0 0.0
    %1168 = vmatprep.subr.mxu0 0.0
    %1169 = vmatpush1.xpose.msra.mxu0 0.0
    %1170 = vmatprep.subr.mxu0 0.0
    %1171 = vmatpush1.xpose.msra.mxu0 0.0
    %1172 = vmatprep.subr.mxu0 0.0
    %1173 = vmatpush1.xpose.msra.mxu0 0.0
    %1174 = vmatprep.subr.mxu0 0.0
    %1175 = vmatpush1.xpose.msra.mxu0 0.0
    %1176 = vmatprep.mubr.f32.mxu0 0.0
    %1177 = vmatmul.mubr.f32.gmra.mrb[0].mxu0 %v1104
    %v1178 = vpop.f32.mrb[0].mxu0
    %v1179 = vadd.f32 %v245, %v1178
    %v1180 = vpop.f32.mrb[0].mxu0
    %1181 = vmatprep.mubr.f32.mxu0 0.0
    %1182 = vmatmul.mubr.f32.gmra.mrb[0].mxu0 %v1106
    %v1183 = vpop.f32.mrb[0].mxu0
    %v1184 = vadd.f32 %v246, %v1183
    %v1185 = vpop.f32.mrb[0].mxu0
    %1186 = vdwg.mxu0
    %v1187 = vsel %vm341, %v1179, -inf
    %1188 = vmax.xlane.f32.xlu0 %v1187
    %v1189 = vpop.xlane.xlu0 %1188
    %v1190 = vsel %vm341, %v1184, -inf
    %1191 = vmax.xlane.f32.xlu0 %v1190
    %v1192 = vpop.xlane.xlu0 %1191
    %v1193 = vsub.f32 %v1179, %v1189
    %v1194 = vsub.f32 %v1184, %v1192
    %v1195 = vmul.f32 %v1193, 1.442695
    %v1196 = vpow.pop %v1195
    %v1197 = vmul.f32 %v1194, 1.442695
    %v1198 = vpow.pop %v1197
    %v1199 = vsel %vm341, %v1196, 0.0
    %1200 = vadd.xlane.f32.xlu0 %v1199
    %v1201 = vpop.xlane.xlu0 %1200
    %v1202 = vsel %vm341, %v1198, 0.0
    %1203 = vadd.xlane.f32.xlu0 %v1202
    %v1204 = vpop.xlane.xlu0 %1203
    %v1205 = vrcp.pop %v1201
    %v1206 = vrcp.pop %v1204
    %v1207 = vmul.f32 %v1196, %v1205
    %v1208 = vmul.f32 %v1198, %v1206
    %1209 = vrot.lane.b32.xlu0 %v227, 40
    %v1210 = vpop.permute.xlu0 %1209
    %1211 = vrot.lane.b32.xlu0 %v232, 40
    %v1212 = vpop.permute.xlu0 %1211
    %v1216 = vsel %vm341, %v1207, 0
    %v1219 = vsel %vm341, %v1208, 0
    %1221 = vmatprep.subr.mxu0 0.0
    %1222 = vmatpush1.msra.mxu0 %v1210
    %1223 = vmatprep.subr.mxu0 0.0
    %1224 = vmatpush1.msra.mxu0 %v1212
    %1225 = vmatprep.subr.mxu0 0.0
    %1226 = vmatpush1.msra.mxu0 0.0
    %1227 = vmatprep.subr.mxu0 0.0
    %1228 = vmatpush1.msra.mxu0 0.0
    %1229 = vmatprep.subr.mxu0 0.0
    %1230 = vmatpush1.msra.mxu0 0.0
    %1231 = vmatprep.subr.mxu0 0.0
    %1232 = vmatpush1.msra.mxu0 0.0
    %1233 = vmatprep.subr.mxu0 0.0
    %1234 = vmatpush1.msra.mxu0 0.0
    %1235 = vmatprep.subr.mxu0 0.0
    %1236 = vmatpush1.msra.mxu0 0.0
    %1237 = vmatprep.subr.mxu0 0.0
    %1238 = vmatpush1.msra.mxu0 0.0
    %1239 = vmatprep.subr.mxu0 0.0
    %1240 = vmatpush1.msra.mxu0 0.0
    %1241 = vmatprep.subr.mxu0 0.0
    %1242 = vmatpush1.msra.mxu0 0.0
    %1243 = vmatprep.subr.mxu0 0.0
    %1244 = vmatpush1.msra.mxu0 0.0
    %1245 = vmatprep.subr.mxu0 0.0
    %1246 = vmatpush1.msra.mxu0 0.0
    %1247 = vmatprep.subr.mxu0 0.0
    %1248 = vmatpush1.msra.mxu0 0.0
    %1249 = vmatprep.subr.mxu0 0.0
    %1250 = vmatpush1.msra.mxu0 0.0
    %1251 = vmatprep.subr.mxu0 0.0
    %1252 = vmatpush1.msra.mxu0 0.0
    %1253 = vmatprep.subr.mxu0 0.0
    %1254 = vmatpush1.msra.mxu0 0.0
    %1255 = vmatprep.subr.mxu0 0.0
    %1256 = vmatpush1.msra.mxu0 0.0
    %1257 = vmatprep.subr.mxu0 0.0
    %1258 = vmatpush1.msra.mxu0 0.0
    %1259 = vmatprep.subr.mxu0 0.0
    %1260 = vmatpush1.msra.mxu0 0.0
    %1261 = vmatprep.subr.mxu0 0.0
    %1262 = vmatpush1.msra.mxu0 0.0
    %1263 = vmatprep.subr.mxu0 0.0
    %1264 = vmatpush1.msra.mxu0 0.0
    %1265 = vmatprep.subr.mxu0 0.0
    %1266 = vmatpush1.msra.mxu0 0.0
    %1267 = vmatprep.subr.mxu0 0.0
    %1268 = vmatpush1.msra.mxu0 0.0
    %1269 = vmatprep.subr.mxu0 0.0
    %1270 = vmatpush1.msra.mxu0 0.0
    %1271 = vmatprep.subr.mxu0 0.0
    %1272 = vmatpush1.msra.mxu0 0.0
    %1273 = vmatprep.subr.mxu0 0.0
    %1274 = vmatpush1.msra.mxu0 0.0
    %1275 = vmatprep.subr.mxu0 0.0
    %1276 = vmatpush1.msra.mxu0 0.0
    %1277 = vmatprep.subr.mxu0 0.0
    %1278 = vmatpush1.msra.mxu0 0.0
    %1279 = vmatprep.subr.mxu0 0.0
    %1280 = vmatpush1.msra.mxu0 0.0
    %1281 = vmatprep.subr.mxu0 0.0
    %1282 = vmatpush1.msra.mxu0 0.0
    %1283 = vmatprep.subr.mxu0 0.0
    %1284 = vmatpush1.msra.mxu0 0.0
    %1285 = vmatprep.mubr.f32.mxu0 0.0
    %1286 = vmatmul.mubr.f32.gmra.mrb[0].mxu0 %v1216
    %v1287 = vpop.f32.mrb[0].mxu0
    %v1288 = vadd.f32 0.0, %v1287
    %v1289 = vpop.f32.mrb[0].mxu0
    %1290 = vmatprep.mubr.f32.mxu0 0.0
    %1291 = vmatmul.mubr.f32.gmra.mrb[0].mxu0 %v1219
    %v1292 = vpop.f32.mrb[0].mxu0
    %v1293 = vadd.f32 0.0, %v1292
    %v1294 = vpop.f32.mrb[0].mxu0
    %1295 = vdwg.mxu0
    %v1297 = vsel %vm257, %v1288, 0
    %v1300 = vsel %vm257, %v1293, 0
    %1302 = vmatprep.subr.mxu0 0.0
    %1303 = vmatpush1.msra.mxu0 %v250
    %1304 = vmatprep.subr.mxu0 0.0
    %1305 = vmatpush1.msra.mxu0 0.0
    %1306 = vmatprep.subr.mxu0 0.0
    %1307 = vmatpush1.msra.mxu0 0.0
    %1308 = vmatprep.subr.mxu0 0.0
    %1309 = vmatpush1.msra.mxu0 0.0
    %1310 = vmatprep.subr.mxu0 0.0
    %1311 = vmatpush1.msra.mxu0 0.0
    %1312 = vmatprep.subr.mxu0 0.0
    %1313 = vmatpush1.msra.mxu0 0.0
    %1314 = vmatprep.subr.mxu0 0.0
    %1315 = vmatpush1.msra.mxu0 0.0
    %1316 = vmatprep.subr.mxu0 0.0
    %1317 = vmatpush1.msra.mxu0 0.0
    %1318 = vmatprep.subr.mxu0 0.0
    %1319 = vmatpush1.msra.mxu0 0.0
    %1320 = vmatprep.subr.mxu0 0.0
    %1321 = vmatpush1.msra.mxu0 0.0
    %1322 = vmatprep.subr.mxu0 0.0
    %1323 = vmatpush1.msra.mxu0 0.0
    %1324 = vmatprep.subr.mxu0 0.0
    %1325 = vmatpush1.msra.mxu0 0.0
    %1326 = vmatprep.subr.mxu0 0.0
    %1327 = vmatpush1.msra.mxu0 0.0
    %1328 = vmatprep.subr.mxu0 0.0
    %1329 = vmatpush1.msra.mxu0 0.0
    %1330 = vmatprep.subr.mxu0 0.0
    %1331 = vmatpush1.msra.mxu0 0.0
    %1332 = vmatprep.subr.mxu0 0.0
    %1333 = vmatpush1.msra.mxu0 0.0
    %1334 = vmatprep.subr.mxu0 0.0
    %1335 = vmatpush1.msra.mxu0 0.0
    %1336 = vmatprep.subr.mxu0 0.0
    %1337 = vmatpush1.msra.mxu0 0.0
    %1338 = vmatprep.subr.mxu0 0.0
    %1339 = vmatpush1.msra.mxu0 0.0
    %1340 = vmatprep.subr.mxu0 0.0
    %1341 = vmatpush1.msra.mxu0 0.0
    %1342 = vmatprep.subr.mxu0 0.0
    %1343 = vmatpush1.msra.mxu0 0.0
    %1344 = vmatprep.subr.mxu0 0.0
    %1345 = vmatpush1.msra.mxu0 0.0
    %1346 = vmatprep.subr.mxu0 0.0
    %1347 = vmatpush1.msra.mxu0 0.0
    %1348 = vmatprep.subr.mxu0 0.0
    %1349 = vmatpush1.msra.mxu0 0.0
    %1350 = vmatprep.subr.mxu0 0.0
    %1351 = vmatpush1.msra.mxu0 0.0
    %1352 = vmatprep.subr.mxu0 0.0
    %1353 = vmatpush1.msra.mxu0 0.0
    %1354 = vmatprep.subr.mxu0 0.0
    %1355 = vmatpush1.msra.mxu0 0.0
    %1356 = vmatprep.subr.mxu0 0.0
    %1357 = vmatpush1.msra.mxu0 0.0
    %1358 = vmatprep.subr.mxu0 0.0
    %1359 = vmatpush1.msra.mxu0 0.0
    %1360 = vmatprep.subr.mxu0 0.0
    %1361 = vmatpush1.msra.mxu0 0.0
    %1362 = vmatprep.subr.mxu0 0.0
    %1363 = vmatpush1.msra.mxu0 0.0
    %1364 = vmatprep.subr.mxu0 0.0
    %1365 = vmatpush1.msra.mxu0 0.0
    %1366 = vmatprep.mubr.f32.mxu0 0.0
    %1367 = vmatmul.mubr.f32.gmra.mrb[0].mxu0 %v1297
    %v1368 = vpop.f32.mrb[0].mxu0
    %v1369 = vadd.f32 0.0, %v1368
    %v1370 = vpop.f32.mrb[0].mxu0
    %1371 = vmatprep.mubr.f32.mxu0 0.0
    %1372 = vmatmul.mubr.f32.gmra.mrb[0].mxu0 %v1300
    %v1373 = vpop.f32.mrb[0].mxu0
    %v1374 = vadd.f32 0.0, %v1373
    %v1375 = vpop.f32.mrb[0].mxu0
    %1376 = vdwg.mxu0
    %v1377 = vadd.f32 %v1094, %v1369
    %v1378 = vadd.f32 %v1095, %v1374
    %v1379 = vadd.f32 %v79, %v1377
    %v1380 = vadd.f32 %v80, %v1378
    %v1381 = vld [vmem:[%s6] sm:$0x1]
    %v1383 = vlaneseq
    %v1384 = vshrl.u32 %v1383, 7
    %v1385 = vsub.s32 0, %v1384
    %v1386 = vrot.slane %v1381, %v1385
    %v1388 = vadd.f32 %v1379, %v1386
    %v1389 = vadd.f32 %v1380, %v1386
    %v1390 = vld [vmem:[%s13] sm:$0x1]
    %v1391 = vld [vmem:[%s14] sm:$0x1]
    %v1392 = vsel %vm84, %v1388, 0.0
    %1393 = vadd.xlane.f32.xlu0 %v1392
    %v1394 = vpop.xlane.xlu0 %1393
    %v1395 = vsel %vm84, %v1389, 0.0
    %1396 = vadd.xlane.f32.xlu0 %v1395
    %v1397 = vpop.xlane.xlu0 %1396
    %v1398 = vmul.f32 %v1394, %v91
    %v1399 = vmul.f32 %v1397, %v91
    %v1400 = vsub.f32 %v1388, %v1398
    %v1401 = vsub.f32 %v1389, %v1399
    %v1402 = vmul.f32 %v1400, %v1400
    %v1403 = vmul.f32 %v1401, %v1401
    %v1404 = vsel %vm84, %v1402, 0.0
    %1405 = vadd.xlane.f32.xlu0 %v1404
    %v1406 = vpop.xlane.xlu0 %1405
    %v1407 = vsel %vm84, %v1403, 0.0
    %1408 = vadd.xlane.f32.xlu0 %v1407
    %v1409 = vpop.xlane.xlu0 %1408
    %v1410 = vmul.f32 %v1406, %v104
    %v1411 = vmul.f32 %v1409, %v104
    %v1412 = vrsqrt.pop %v1410
    %v1413 = vmul.f32 %v1410, %v1412
    %vm1414 = vcmp.eq.f32.partialorder %v1410, inf
    %v1415 = vsel %vm1414, %v1410, %v1413
    %vm1416 = vcmp.eq.f32.partialorder %v1410, 0.0
    %v1417 = vand.u32 %v1410, 2147483648
    %v1418 = vsel %vm1416, %v1417, %v1415
    %v1419 = vrsqrt.pop %v1411
    %v1420 = vmul.f32 %v1411, %v1419
    %vm1421 = vcmp.eq.f32.partialorder %v1411, inf
    %v1422 = vsel %vm1421, %v1411, %v1420
    %vm1423 = vcmp.eq.f32.partialorder %v1411, 0.0
    %v1424 = vand.u32 %v1411, 2147483648
    %v1425 = vsel %vm1423, %v1424, %v1422
    %v1426 = vadd.f32 %v1418, 1e-06
    %v1427 = vadd.f32 %v1425, 1e-06
    %v1428 = vrcp.pop %v1426
    %v1429 = vrcp.pop %v1427
    %v1431 = vlaneseq
    %v1432 = vshrl.u32 %v1431, 7
    %v1433 = vsub.s32 0, %v1432
    %v1434 = vrot.slane %v1390, %v1433
    %v1436 = vmul.f32 %v1434, %v1400
    %v1437 = vmul.f32 %v1434, %v1401
    %v1438 = vmul.f32 %v1436, %v1428
    %v1439 = vmul.f32 %v1437, %v1429
    %v1441 = vlaneseq
    %v1442 = vshrl.u32 %v1441, 7
    %v1443 = vsub.s32 0, %v1442
    %v1444 = vrot.slane %v1391, %v1443
    %v1446 = vadd.f32 %v1438, %v1444
    %v1447 = vadd.f32 %v1439, %v1444
    %v1448 = vld [vmem:[%s9] sm:$0xff]
    %v1449 = vld [vmem:[%s9 + $0x8] sm:$0xff]
    %v1450 = vld [vmem:[%s9 + $0x10] sm:$0xff]
    %v1451 = vld [vmem:[%s9 + $0x18] sm:$0xff]
    %v1452 = vld [vmem:[%s10] sm:$0x1]
    %v1454 = vlaneseq
    %v1455 = vshrl.u32 %v1454, 7
    %v1456 = vsub.s32 0, %v1455
    %v1457 = vrot.slane %v1452, %v1456
    %v1460 = vsel %vm84, %v1446, 0
    %v1463 = vsel %vm84, %v1447, 0
    %1465 = vmatprep.subr.mxu0 0.0
    %1466 = vmatpush1.msra.mxu0 %v1448
    %1467 = vmatprep.subr.mxu0 0.0
    %1468 = vmatpush1.msra.mxu0 %v1449
    %1469 = vmatprep.subr.mxu0 0.0
    %1470 = vmatpush1.msra.mxu0 %v1450
    %1471 = vmatprep.subr.mxu0 0.0
    %1472 = vmatpush1.msra.mxu0 %v1451
    %1473 = vmatprep.subr.mxu0 0.0
    %1474 = vmatpush1.msra.mxu0 0.0
    %1475 = vmatprep.subr.mxu0 0.0
    %1476 = vmatpush1.msra.mxu0 0.0
    %1477 = vmatprep.subr.mxu0 0.0
    %1478 = vmatpush1.msra.mxu0 0.0
    %1479 = vmatprep.subr.mxu0 0.0
    %1480 = vmatpush1.msra.mxu0 0.0
    %1481 = vmatprep.subr.mxu0 0.0
    %1482 = vmatpush1.msra.mxu0 0.0
    %1483 = vmatprep.subr.mxu0 0.0
    %1484 = vmatpush1.msra.mxu0 0.0
    %1485 = vmatprep.subr.mxu0 0.0
    %1486 = vmatpush1.msra.mxu0 0.0
    %1487 = vmatprep.subr.mxu0 0.0
    %1488 = vmatpush1.msra.mxu0 0.0
    %1489 = vmatprep.subr.mxu0 0.0
    %1490 = vmatpush1.msra.mxu0 0.0
    %1491 = vmatprep.subr.mxu0 0.0
    %1492 = vmatpush1.msra.mxu0 0.0
    %1493 = vmatprep.subr.mxu0 0.0
    %1494 = vmatpush1.msra.mxu0 0.0
    %1495 = vmatprep.subr.mxu0 0.0
    %1496 = vmatpush1.msra.mxu0 0.0
    %1497 = vmatprep.subr.mxu0 0.0
    %1498 = vmatpush1.msra.mxu0 0.0
    %1499 = vmatprep.subr.mxu0 0.0
    %1500 = vmatpush1.msra.mxu0 0.0
    %1501 = vmatprep.subr.mxu0 0.0
    %1502 = vmatpush1.msra.mxu0 0.0
    %1503 = vmatprep.subr.mxu0 0.0
    %1504 = vmatpush1.msra.mxu0 0.0
    %1505 = vmatprep.subr.mxu0 0.0
    %1506 = vmatpush1.msra.mxu0 0.0
    %1507 = vmatprep.subr.mxu0 0.0
    %1508 = vmatpush1.msra.mxu0 0.0
    %1509 = vmatprep.subr.mxu0 0.0
    %1510 = vmatpush1.msra.mxu0 0.0
    %1511 = vmatprep.subr.mxu0 0.0
    %1512 = vmatpush1.msra.mxu0 0.0
    %1513 = vmatprep.subr.mxu0 0.0
    %1514 = vmatpush1.msra.mxu0 0.0
    %1515 = vmatprep.subr.mxu0 0.0
    %1516 = vmatpush1.msra.mxu0 0.0
    %1517 = vmatprep.subr.mxu0 0.0
    %1518 = vmatpush1.msra.mxu0 0.0
    %1519 = vmatprep.subr.mxu0 0.0
    %1520 = vmatpush1.msra.mxu0 0.0
    %1521 = vmatprep.subr.mxu0 0.0
    %1522 = vmatpush1.msra.mxu0 0.0
    %1523 = vmatprep.subr.mxu0 0.0
    %1524 = vmatpush1.msra.mxu0 0.0
    %1525 = vmatprep.subr.mxu0 0.0
    %1526 = vmatpush1.msra.mxu0 0.0
    %1527 = vmatprep.subr.mxu0 0.0
    %1528 = vmatpush1.msra.mxu0 0.0
    %1529 = vmatprep.mubr.f32.mxu0 0.0
    %1530 = vmatmul.mubr.f32.gmra.mrb[0].mxu0 %v1460
    %v1531 = vpop.f32.mrb[0].mxu0
    %v1532 = vadd.f32 %v1457, %v1531
    %v1533 = vpop.f32.mrb[0].mxu0
    %1534 = vmatprep.mubr.f32.mxu0 0.0
    %1535 = vmatmul.mubr.f32.gmra.mrb[0].mxu0 %v1463
    %v1536 = vpop.f32.mrb[0].mxu0
    %v1537 = vadd.f32 %v1457, %v1536
    %v1538 = vpop.f32.mrb[0].mxu0
    %1539 = vdwg.mxu0
    %v1540 = vmax.f32 %v1532, 0.0
    %v1541 = vmax.f32 %v1537, 0.0
    %v1542 = vld [vmem:[%s11] sm:$0xff]
    %v1543 = vld [vmem:[%s11 + $0x8] sm:$0xff]
    %v1544 = vld [vmem:[%s11 + $0x10] sm:$0xff]
    %v1545 = vld [vmem:[%s11 + $0x18] sm:$0xff]
    %v1546 = vld [vmem:[%s11 + $0x20] sm:$0xff]
    %v1547 = vld [vmem:[%s11 + $0x28] sm:$0xff]
    %v1548 = vld [vmem:[%s11 + $0x30] sm:$0xff]
    %v1549 = vld [vmem:[%s11 + $0x38] sm:$0xff]
    %v1550 = vld [vmem:[%s12] sm:$0x1]
    %v1552 = vlaneseq
    %v1553 = vshrl.u32 %v1552, 7
    %v1554 = vsub.s32 0, %v1553
    %v1555 = vrot.slane %v1550, %v1554
    %vm1557 = vcmask 523264
    %v1559 = vsel %vm1557, %v1540, 0
    %v1562 = vsel %vm1557, %v1541, 0
    %1564 = vmatprep.subr.mxu0 0.0
    %1565 = vmatpush1.msra.mxu0 %v1542
    %1566 = vmatprep.subr.mxu0 0.0
    %1567 = vmatpush1.msra.mxu0 %v1543
    %1568 = vmatprep.subr.mxu0 0.0
    %1569 = vmatpush1.msra.mxu0 %v1544
    %1570 = vmatprep.subr.mxu0 0.0
    %1571 = vmatpush1.msra.mxu0 %v1545
    %1572 = vmatprep.subr.mxu0 0.0
    %1573 = vmatpush1.msra.mxu0 %v1546
    %1574 = vmatprep.subr.mxu0 0.0
    %1575 = vmatpush1.msra.mxu0 %v1547
    %1576 = vmatprep.subr.mxu0 0.0
    %1577 = vmatpush1.msra.mxu0 %v1548
    %1578 = vmatprep.subr.mxu0 0.0
    %1579 = vmatpush1.msra.mxu0 %v1549
    %1580 = vmatprep.subr.mxu0 0.0
    %1581 = vmatpush1.msra.mxu0 0.0
    %1582 = vmatprep.subr.mxu0 0.0
    %1583 = vmatpush1.msra.mxu0 0.0
    %1584 = vmatprep.subr.mxu0 0.0
    %1585 = vmatpush1.msra.mxu0 0.0
    %1586 = vmatprep.subr.mxu0 0.0
    %1587 = vmatpush1.msra.mxu0 0.0
    %1588 = vmatprep.subr.mxu0 0.0
    %1589 = vmatpush1.msra.mxu0 0.0
    %1590 = vmatprep.subr.mxu0 0.0
    %1591 = vmatpush1.msra.mxu0 0.0
    %1592 = vmatprep.subr.mxu0 0.0
    %1593 = vmatpush1.msra.mxu0 0.0
    %1594 = vmatprep.subr.mxu0 0.0
    %1595 = vmatpush1.msra.mxu0 0.0
    %1596 = vmatprep.subr.mxu0 0.0
    %1597 = vmatpush1.msra.mxu0 0.0
    %1598 = vmatprep.subr.mxu0 0.0
    %1599 = vmatpush1.msra.mxu0 0.0
    %1600 = vmatprep.subr.mxu0 0.0
    %1601 = vmatpush1.msra.mxu0 0.0
    %1602 = vmatprep.subr.mxu0 0.0
    %1603 = vmatpush1.msra.mxu0 0.0
    %1604 = vmatprep.subr.mxu0 0.0
    %1605 = vmatpush1.msra.mxu0 0.0
    %1606 = vmatprep.subr.mxu0 0.0
    %1607 = vmatpush1.msra.mxu0 0.0
    %1608 = vmatprep.subr.mxu0 0.0
    %1609 = vmatpush1.msra.mxu0 0.0
    %1610 = vmatprep.subr.mxu0 0.0
    %1611 = vmatpush1.msra.mxu0 0.0
    %1612 = vmatprep.subr.mxu0 0.0
    %1613 = vmatpush1.msra.mxu0 0.0
    %1614 = vmatprep.subr.mxu0 0.0
    %1615 = vmatpush1.msra.mxu0 0.0
    %1616 = vmatprep.subr.mxu0 0.0
    %1617 = vmatpush1.msra.mxu0 0.0
    %1618 = vmatprep.subr.mxu0 0.0
    %1619 = vmatpush1.msra.mxu0 0.0
    %1620 = vmatprep.subr.mxu0 0.0
    %1621 = vmatpush1.msra.mxu0 0.0
    %1622 = vmatprep.subr.mxu0 0.0
    %1623 = vmatpush1.msra.mxu0 0.0
    %1624 = vmatprep.subr.mxu0 0.0
    %1625 = vmatpush1.msra.mxu0 0.0
    %1626 = vmatprep.subr.mxu0 0.0
    %1627 = vmatpush1.msra.mxu0 0.0
    %1628 = vmatprep.mubr.f32.mxu0 0.0
    %1629 = vmatmul.mubr.f32.gmra.mrb[0].mxu0 %v1559
    %v1630 = vpop.f32.mrb[0].mxu0
    %v1631 = vadd.f32 %v1555, %v1630
    %v1632 = vpop.f32.mrb[0].mxu0
    %1633 = vmatprep.mubr.f32.mxu0 0.0
    %1634 = vmatmul.mubr.f32.gmra.mrb[0].mxu0 %v1562
    %v1635 = vpop.f32.mrb[0].mxu0
    %v1636 = vadd.f32 %v1555, %v1635
    %v1637 = vpop.f32.mrb[0].mxu0
    %1638 = vdwg.mxu0
    %v1639 = vadd.f32 %v1388, %v1631
    %v1640 = vadd.f32 %v1389, %v1636
    %1641 = vst.msk [vmem:[#allocation7] sm:$0xff] %vm84, %v1639
    %1642 = vst.msk [vmem:[#allocation7 + $0x8] sm:$0xff] %vm84, %v1640
    // Predicated region
    $region70: #{tpu_custom_call.1} parent=1 // pred_check
      _
    $region71: #{tpu_custom_call.1} parent=1 // pred_check_branch
      %1644 = sbr.rel (0) target = $region73
    $region72: #{tpu_custom_call.1} parent=1 // pred_region
      %s1646 = ssub.s32 256, 256
      %1647 = vsyncadd [#allocation4], %s1646
      %s1648 = sshll.u32 [#allocation7], 4
      %s1649 = int_to_ptr.vmem [resolvable:$true] %s1648
      %1654 = dma.vmem_to_hbm [thread:$0]  %s1649, 256, %s15, [#allocation4], 128, 128, 8
    $region73: #{tpu_custom_call.1} parent=1 // pred_fallthru
      _
    // Predicated region
    $region74: #{tpu_custom_call.1} parent=1 // pred_check
      _
    $region75: #{tpu_custom_call.1} parent=1 // pred_check_branch
      %1656 = sbr.rel (0) target = $region77
    $region76: #{tpu_custom_call.1} parent=1 // pred_region
      %1657 = dma.done [#allocation4], 256
    $region77: #{tpu_custom_call.1} parent=1 // pred_fallthru
      _
    %1658 = vsyncpa [#allocation3], 1
    %1659 = vsyncpa [#allocation6], 1
    %1660 = vsyncpa [#allocation4], 1

</llo_original>
